<compile_context>
chip_gen: v7x
topology: tpu7x:2x2x1
jax: 0.10.0
libtpu: 0.0.40
codegen_flags: <defaults>
</compile_context>

<pallas_src>
import numpy as np
import jax
import jax.numpy as jnp
from jax.experimental import pallas as pl
from jax.experimental.pallas import tpu as pltpu

# --- model hyper-parameters (small, consistent with the module) ---------------
d_model = 32
d_k = 8
d_v = 8
n_heads = 4
d_ff = 64
n_layers = 2
MAX_LEN = 64          # smaller than 5000 to keep the example tiny
LN_EPS = 1e-5
ATTN_SCALE = 1.0 / float(np.sqrt(d_k))

HDK = n_heads * d_k    # 32
HDV = n_heads * d_v    # 32


# ------------------------------------------------------------------------------
# Positional-encoding table (exact reproduction of the PyTorch construction)
# ------------------------------------------------------------------------------
def make_pos_table(d_model_: int, max_len: int = 5000) -> np.ndarray:
    pos_table = np.array(
        [
            [pos / np.power(10000, 2 * i / d_model_) for i in range(d_model_)]
            if pos != 0
            else np.zeros(d_model_)
            for pos in range(max_len)
        ]
    )
    pos_table[1:, 0::2] = np.sin(pos_table[1:, 0::2])
    pos_table[1:, 1::2] = np.cos(pos_table[1:, 1::2])
    return pos_table.astype(np.float32)


# ------------------------------------------------------------------------------
# Fused encoder kernel: one grid step = one batch element, all layers.
# ------------------------------------------------------------------------------
def _layer_norm(y, g, b):
    """f32 LayerNorm over the last axis. y: (S, D); g, b: (1, D)."""
    mean = jnp.mean(y, axis=-1, keepdims=True)
    cen = y - mean
    var = jnp.mean(cen * cen, axis=-1, keepdims=True)
    return cen * jax.lax.rsqrt(var + LN_EPS) * g + b


def _encoder_kernel(
    x_ref,        # (1, S, D)        f32   input activations
    pos_ref,      # (1, S, D)        f32   positional table slice
    bias_ref,     # (1, 1, S)        f32   additive key-pad bias (0 or -1e9)
    wqkv_ref,     # (L, D, 3*HDK)    bf16  [W_Q | W_K | W_V]
    wfc_ref,      # (L, HDV, D)      bf16
    ln1g_ref,     # (L, 1, D)        f32
    ln1b_ref,     # (L, 1, D)        f32
    w1_ref,       # (L, D, d_ff)     bf16
    w2_ref,       # (L, d_ff, D)     bf16
    ln2g_ref,     # (L, 1, D)        f32
    ln2b_ref,     # (L, 1, D)        f32
    out_ref,      # (1, S, D)        f32
    attn_ref,     # (L*H, 1, S, S)   f32
):
    f32 = jnp.float32
    bf16 = jnp.bfloat16

    # Positional encoding (fused).
    x = x_ref[0] + pos_ref[0]            # (S, D) f32
    bias = bias_ref[0]                   # (1, S) f32, broadcasts over query rows

    for l in range(n_layers):            # static unroll (n_layers = 2)
        # ---- multi-head self-attention -------------------------------------
        # Fused Q/K/V projection: one (S, D) @ (D, 3*HDK) matmul on the MXU.
        qkv = jnp.dot(x.astype(bf16), wqkv_ref[l],
                      preferred_element_type=f32)        # (S, 3*HDK) f32
        q = qkv[:, 0:HDK]
        k = qkv[:, HDK:2 * HDK]
        v = qkv[:, 2 * HDK:2 * HDK + HDV]

        ctx_parts = []
        for h in range(n_heads):         # static unroll (n_heads = 4)
            qh = q[:, h * d_k:(h + 1) * d_k].astype(bf16)    # (S, d_k)
            kh = k[:, h * d_k:(h + 1) * d_k].astype(bf16)    # (S, d_k)
            vh = v[:, h * d_v:(h + 1) * d_v].astype(bf16)    # (S, d_v)

            # scores = Q @ K^T / sqrt(d_k) + pad bias   (f32 accumulation)
            scores = jax.lax.dot_general(
                qh, kh, (((1,), (1,)), ((), ())),
                preferred_element_type=f32) * ATTN_SCALE + bias      # (S, S)

            # softmax (f32 on the VPU; reciprocal on the EUP slot)
            scores = scores - jnp.max(scores, axis=-1, keepdims=True)
            e = jnp.exp(scores)
            attn = e * pl.reciprocal(jnp.sum(e, axis=-1, keepdims=True),
                                     approx=True)
            attn_ref[l * n_heads + h, 0, :, :] = attn.astype(attn_ref.dtype)

            ctx_parts.append(
                jnp.dot(attn.astype(bf16), vh, preferred_element_type=f32))

        # Lane-dense (S, H*dv) context slab feeds the fc matmul directly
        # (no (B,H,S,dv) HBM layout / transpose).
        ctx = jnp.concatenate(ctx_parts, axis=-1)                    # (S, HDV)

        mha_out = jnp.dot(ctx.astype(bf16), wfc_ref[l],
                          preferred_element_type=f32)                # (S, D)
        x1 = _layer_norm(mha_out + x, ln1g_ref[l], ln1b_ref[l])      # residual+LN

        # ---- position-wise FFN ---------------------------------------------
        h1 = jnp.dot(x1.astype(bf16), w1_ref[l], preferred_element_type=f32)
        h1 = jnp.maximum(h1, 0.0)                                    # ReLU (f32)
        ffn_out = jnp.dot(h1.astype(bf16), w2_ref[l],
                          preferred_element_type=f32)                # (S, D)
        x = _layer_norm(ffn_out + x1, ln2g_ref[l], ln2b_ref[l])      # residual+LN

    out_ref[0] = x.astype(out_ref.dtype)


def encoder_forward(enc_inputs, enc_inputs_mask, params):
    """enc_inputs: (B, S, d_model) f32; enc_inputs_mask: (B, S) int (0 = pad)."""
    B, S, D = enc_inputs.shape
    L = n_layers

    pos = params["pos_table"][:S, :].reshape(1, S, D)

    # get_attn_pad_mask depends only on key positions -> additive bias (B,1,S).
    bias = jnp.where(enc_inputs_mask == 0,
                     jnp.float32(-1e9), jnp.float32(0.0))[:, None, :]

    # Stack per-layer weights on a leading layer axis; MXU operands in bf16,
    # LayerNorm params stay f32 (VPU math is f32 everywhere).
    bf16 = jnp.bfloat16
    wqkv = jnp.stack([
        jnp.concatenate(
            [lp["mha"]["W_Q"], lp["mha"]["W_K"], lp["mha"]["W_V"]], axis=1)
        for lp in params["layers"]]).astype(bf16)                    # (L, D, 3*HDK)
    wfc = jnp.stack([lp["mha"]["fc"] for lp in params["layers"]]).astype(bf16)
    ln1g = jnp.stack([lp["mha"]["ln_g"].reshape(1, D) for lp in params["layers"]])
    ln1b = jnp.stack([lp["mha"]["ln_b"].reshape(1, D) for lp in params["layers"]])
    w1 = jnp.stack([lp["ffn"]["W1"] for lp in params["layers"]]).astype(bf16)
    w2 = jnp.stack([lp["ffn"]["W2"] for lp in params["layers"]]).astype(bf16)
    ln2g = jnp.stack([lp["ffn"]["ln_g"].reshape(1, D) for lp in params["layers"]])
    ln2b = jnp.stack([lp["ffn"]["ln_b"].reshape(1, D) for lp in params["layers"]])

    const = lambda block: pl.BlockSpec(block, lambda b: (0,) * len(block))

    out, attn_all = pl.pallas_call(
        _encoder_kernel,
        out_shape=(
            jax.ShapeDtypeStruct((B, S, D), jnp.float32),
            jax.ShapeDtypeStruct((L * n_heads, B, S, S), jnp.float32),
        ),
        grid_spec=pltpu.PrefetchScalarGridSpec(
            num_scalar_prefetch=0,
            grid=(B,),
            in_specs=[
                pl.BlockSpec((1, S, D), lambda b: (b, 0, 0)),    # x (per batch)
                const((1, S, D)),                                # pos table
                pl.BlockSpec((1, 1, S), lambda b: (b, 0, 0)),    # pad bias
                const((L, D, 3 * HDK)),                          # W_QKV
                const((L, HDV, D)),                              # fc
                const((L, 1, D)),                                # ln1 gamma
                const((L, 1, D)),                                # ln1 beta
                const((L, D, d_ff)),                             # ffn W1
                const((L, d_ff, D)),                             # ffn W2
                const((L, 1, D)),                                # ln2 gamma
                const((L, 1, D)),                                # ln2 beta
            ],
            out_specs=(
                pl.BlockSpec((1, S, D), lambda b: (b, 0, 0)),
                pl.BlockSpec((L * n_heads, 1, S, S), lambda b: (0, b, 0, 0)),
            ),
        ),
        compiler_params=pltpu.CompilerParams(
            dimension_semantics=("parallel",),   # batch shards across v7x's 2 TCs
        ),
    )(enc_inputs, pos, bias, wqkv, wfc, ln1g, ln1b, w1, w2, ln2g, ln2b)

    # (L*H, B, S, S) -> list of (B, H, S, S), matching the PyTorch return.
    attn_all = attn_all.reshape(L, n_heads, B, S, S).transpose(0, 2, 1, 3, 4)
    attns = [attn_all[i] for i in range(L)]
    return out, attns


# ------------------------------------------------------------------------------
# Params + pure-JAX reference (for correctness check)
# ------------------------------------------------------------------------------
def init_encoder_params(key):
    params = {"pos_table": jnp.asarray(make_pos_table(d_model, MAX_LEN))}
    layers = []
    for _ in range(n_layers):
        key, *ks = jax.random.split(key, 7)
        mha = {
            "W_Q": 0.1 * jax.random.normal(ks[0], (d_model, HDK), jnp.float32),
            "W_K": 0.1 * jax.random.normal(ks[1], (d_model, HDK), jnp.float32),
            "W_V": 0.1 * jax.random.normal(ks[2], (d_model, HDV), jnp.float32),
            "fc": 0.1 * jax.random.normal(ks[3], (HDV, d_model), jnp.float32),
            "ln_g": jnp.ones((d_model,), jnp.float32),
            "ln_b": jnp.zeros((d_model,), jnp.float32),
        }
        ffn_p = {
            "W1": 0.1 * jax.random.normal(ks[4], (d_model, d_ff), jnp.float32),
            "W2": 0.1 * jax.random.normal(ks[5], (d_ff, d_model), jnp.float32),
            "ln_g": jnp.ones((d_model,), jnp.float32),
            "ln_b": jnp.zeros((d_model,), jnp.float32),
        }
        layers.append({"mha": mha, "ffn": ffn_p})
    params["layers"] = layers
    return params


def _layer_norm_ref(y, g, b, eps=LN_EPS):
    mean = jnp.mean(y, axis=-1, keepdims=True)
    var = jnp.mean(jnp.square(y - mean), axis=-1, keepdims=True)
    return (y - mean) * jax.lax.rsqrt(var + eps) * g + b


def encoder_ref(enc_inputs, enc_inputs_mask, params):
    B, S, D = enc_inputs.shape
    x = enc_inputs + params["pos_table"][:S][None]
    pad = (enc_inputs_mask == 0)[:, None, None, :]   # (B,1,1,S)
    attns = []
    for lp in params["layers"]:
        mp = lp["mha"]
        q = (x @ mp["W_Q"]).reshape(B, S, n_heads, d_k).transpose(0, 2, 1, 3)
        k = (x @ mp["W_K"]).reshape(B, S, n_heads, d_k).transpose(0, 2, 1, 3)
        v = (x @ mp["W_V"]).reshape(B, S, n_heads, d_v).transpose(0, 2, 1, 3)
        scores = jnp.einsum("bhqd,bhkd->bhqk", q, k) * ATTN_SCALE
        scores = jnp.where(pad, -1e9, scores)
        attn = jax.nn.softmax(scores, axis=-1)
        ctx = jnp.einsum("bhqk,bhkd->bhqd", attn, v)
        ctx = ctx.transpose(0, 2, 1, 3).reshape(B, S, n_heads * d_v)
        x1 = _layer_norm_ref(ctx @ mp["fc"] + x, mp["ln_g"], mp["ln_b"])
        fp = lp["ffn"]
        h = jnp.maximum(x1 @ fp["W1"], 0.0)
        x = _layer_norm_ref(h @ fp["W2"] + x1, fp["ln_g"], fp["ln_b"])
        attns.append(attn)
    return x, attns


# ------------------------------------------------------------------------------
if __name__ == "__main__":
    B, S = 2, 8

    key = jax.random.PRNGKey(0)
    k_in, k_par = jax.random.split(key)
    enc_inputs = jax.random.normal(k_in, (B, S, d_model), dtype=jnp.float32)
    # token-id mask; 0 marks padding (used by get_attn_pad_mask)
    enc_inputs_mask = jnp.array(
        [[3, 7, 5, 2, 9, 0, 0, 0],
         [4, 1, 8, 6, 2, 5, 7, 0]], dtype=jnp.int32)

    params = init_encoder_params(k_par)

    out, attns = encoder_forward(enc_inputs, enc_inputs_mask, params)
    out = jax.block_until_ready(out)

    out_ref, attns_ref = encoder_ref(enc_inputs, enc_inputs_mask, params)

    # Tolerances account for bf16 MXU operands (f32 accumulation) and the
    # EUP approximate reciprocal in the softmax normalization.
    np.testing.assert_allclose(np.asarray(out), np.asarray(out_ref),
                               rtol=3e-2, atol=3e-2)
    np.testing.assert_allclose(np.asarray(jnp.stack(attns)),
                               np.asarray(jnp.stack(attns_ref)),
                               rtol=2e-2, atol=2e-2)

    assert out.shape == (B, S, d_model)
    assert len(attns) == n_layers and attns[0].shape == (B, n_heads, S, S)

    print("KERNEL_OK")
</pallas_src>

<mosaic_0001>
module attributes {stable_mosaic.version = 11 : i64} {
  func.func @_encoder_kernel(%arg0: i32, %arg1: memref<1x8x32xf32, #tpu.memory_space<vmem>>, %arg2: memref<1x8x32xf32, #tpu.memory_space<vmem>>, %arg3: memref<1x1x8xf32, #tpu.memory_space<vmem>>, %arg4: memref<2x32x96xbf16, #tpu.memory_space<vmem>>, %arg5: memref<2x32x32xbf16, #tpu.memory_space<vmem>>, %arg6: memref<2x1x32xf32, #tpu.memory_space<vmem>>, %arg7: memref<2x1x32xf32, #tpu.memory_space<vmem>>, %arg8: memref<2x32x64xbf16, #tpu.memory_space<vmem>>, %arg9: memref<2x64x32xbf16, #tpu.memory_space<vmem>>, %arg10: memref<2x1x32xf32, #tpu.memory_space<vmem>>, %arg11: memref<2x1x32xf32, #tpu.memory_space<vmem>>, %arg12: memref<1x8x32xf32, #tpu.memory_space<vmem>>, %arg13: memref<8x1x8x8xf32, #tpu.memory_space<vmem>>) attributes {dimension_semantics = [#tpu.dimension_semantics<parallel>], iteration_bounds = array<i64: 2>, scalar_prefetch = 0 : i64, scratch_operands = 0 : i64, tpu.core_type = #tpu.core_type<tc>, window_params = [{transform_indices = @transform_0, window_bounds = array<i64: 1, 8, 32>}, {pipeline_mode = #tpu.pipeline_mode<synchronous>, transform_indices = @transform_1, window_bounds = array<i64: 1, 8, 32>}, {transform_indices = @transform_2, window_bounds = array<i64: 1, 1, 8>}, {pipeline_mode = #tpu.pipeline_mode<synchronous>, transform_indices = @transform_3, window_bounds = array<i64: 2, 32, 96>}, {pipeline_mode = #tpu.pipeline_mode<synchronous>, transform_indices = @transform_4, window_bounds = array<i64: 2, 32, 32>}, {pipeline_mode = #tpu.pipeline_mode<synchronous>, transform_indices = @transform_5, window_bounds = array<i64: 2, 1, 32>}, {pipeline_mode = #tpu.pipeline_mode<synchronous>, transform_indices = @transform_6, window_bounds = array<i64: 2, 1, 32>}, {pipeline_mode = #tpu.pipeline_mode<synchronous>, transform_indices = @transform_7, window_bounds = array<i64: 2, 32, 64>}, {pipeline_mode = #tpu.pipeline_mode<synchronous>, transform_indices = @transform_8, window_bounds = array<i64: 2, 64, 32>}, {pipeline_mode = #tpu.pipeline_mode<synchronous>, transform_indices = @transform_9, window_bounds = array<i64: 2, 1, 32>}, {pipeline_mode = #tpu.pipeline_mode<synchronous>, transform_indices = @transform_10, window_bounds = array<i64: 2, 1, 32>}, {transform_indices = @transform_11, window_bounds = array<i64: 1, 8, 32>}, {transform_indices = @transform_12, window_bounds = array<i64: 8, 1, 8, 8>}]} {
    %c0 = arith.constant 0 : index
    %c0_0 = arith.constant 0 : index
    %c0_1 = arith.constant 0 : index
    %0 = vector.load %arg1[%c0, %c0_0, %c0_1] : memref<1x8x32xf32, #tpu.memory_space<vmem>>, vector<1x8x32xf32>
    %1 = vector.shape_cast %0 : vector<1x8x32xf32> to vector<8x32xf32>
    %c0_2 = arith.constant 0 : index
    %c0_3 = arith.constant 0 : index
    %c0_4 = arith.constant 0 : index
    %2 = vector.load %arg2[%c0_2, %c0_3, %c0_4] : memref<1x8x32xf32, #tpu.memory_space<vmem>>, vector<1x8x32xf32>
    %3 = vector.shape_cast %2 : vector<1x8x32xf32> to vector<8x32xf32>
    %4 = arith.addf %1, %3 : vector<8x32xf32>
    %c0_5 = arith.constant 0 : index
    %c0_6 = arith.constant 0 : index
    %c0_7 = arith.constant 0 : index
    %5 = vector.load %arg3[%c0_5, %c0_6, %c0_7] : memref<1x1x8xf32, #tpu.memory_space<vmem>>, vector<1x1x8xf32>
    %6 = vector.shape_cast %5 : vector<1x1x8xf32> to vector<1x8xf32>
    %7 = arith.truncf %4 : vector<8x32xf32> to vector<8x32xbf16>
    %c0_8 = arith.constant 0 : index
    %c0_9 = arith.constant 0 : index
    %c0_10 = arith.constant 0 : index
    %8 = vector.load %arg4[%c0_8, %c0_9, %c0_10] : memref<2x32x96xbf16, #tpu.memory_space<vmem>>, vector<1x32x96xbf16>
    %9 = vector.shape_cast %8 : vector<1x32x96xbf16> to vector<32x96xbf16>
    %cst = arith.constant dense<0.000000e+00> : vector<8x96xf32>
    %10 = tpu.matmul %7, %9, %cst {dimension_numbers = #tpu.dot_dimension_numbers<[1], [0], [0], [1], [0, 0, 1, 1], [], []>} : vector<8x32xbf16>, vector<32x96xbf16>, vector<8x96xf32> -> vector<8x96xf32>
    %11 = vector.extract_strided_slice %10 {offsets = [0, 0], sizes = [8, 32], strides = [1, 1]} : vector<8x96xf32> to vector<8x32xf32>
    %12 = vector.extract_strided_slice %10 {offsets = [0, 32], sizes = [8, 32], strides = [1, 1]} : vector<8x96xf32> to vector<8x32xf32>
    %13 = vector.extract_strided_slice %10 {offsets = [0, 64], sizes = [8, 32], strides = [1, 1]} : vector<8x96xf32> to vector<8x32xf32>
    %14 = vector.extract_strided_slice %11 {offsets = [0, 0], sizes = [8, 8], strides = [1, 1]} : vector<8x32xf32> to vector<8x8xf32>
    %15 = arith.truncf %14 : vector<8x8xf32> to vector<8x8xbf16>
    %16 = vector.extract_strided_slice %12 {offsets = [0, 0], sizes = [8, 8], strides = [1, 1]} : vector<8x32xf32> to vector<8x8xf32>
    %17 = arith.truncf %16 : vector<8x8xf32> to vector<8x8xbf16>
    %18 = vector.extract_strided_slice %13 {offsets = [0, 0], sizes = [8, 8], strides = [1, 1]} : vector<8x32xf32> to vector<8x8xf32>
    %19 = arith.truncf %18 : vector<8x8xf32> to vector<8x8xbf16>
    %cst_11 = arith.constant dense<0.000000e+00> : vector<8x8xf32>
    %20 = tpu.matmul %15, %17, %cst_11 {dimension_numbers = #tpu.dot_dimension_numbers<[1], [1], [0], [0], [0, 0, 1, 0], [], []>} : vector<8x8xbf16>, vector<8x8xbf16>, vector<8x8xf32> -> vector<8x8xf32>
    %cst_12 = arith.constant 0.353553385 : f32
    %21 = vector.broadcast %cst_12 : f32 to vector<8x8xf32>
    %22 = arith.mulf %20, %21 : vector<8x8xf32>
    %23 = vector.broadcast %6 : vector<1x8xf32> to vector<8x8xf32>
    %24 = arith.addf %22, %23 : vector<8x8xf32>
    %cst_13 = arith.constant dense<0xFF800000> : vector<8xf32>
    %25 = vector.multi_reduction <maximumf>, %24, %cst_13 [1] : vector<8x8xf32> to vector<8xf32>
    %26 = vector.shape_cast %25 : vector<8xf32> to vector<8x1xf32>
    %27 = vector.broadcast %26 : vector<8x1xf32> to vector<8x8xf32>
    %28 = arith.subf %24, %27 : vector<8x8xf32>
    %29 = math.exp %28 : vector<8x8xf32>
    %cst_14 = arith.constant dense<0.000000e+00> : vector<8xf32>
    %30 = vector.multi_reduction <add>, %29, %cst_14 [1] : vector<8x8xf32> to vector<8xf32>
    %31 = vector.shape_cast %30 : vector<8xf32> to vector<8x1xf32>
    %32 = tpu.reciprocal %31 {approx = true} : vector<8x1xf32> -> vector<8x1xf32>
    %33 = vector.broadcast %32 : vector<8x1xf32> to vector<8x8xf32>
    %34 = arith.mulf %29, %33 : vector<8x8xf32>
    %c0_15 = arith.constant 0 : index
    %c0_16 = arith.constant 0 : index
    %c0_17 = arith.constant 0 : index
    %c0_18 = arith.constant 0 : index
    %35 = vector.load %arg13[%c0_15, %c0_16, %c0_17, %c0_18] : memref<8x1x8x8xf32, #tpu.memory_space<vmem>>, vector<1x1x8x8xf32>
    %36 = vector.shape_cast %35 : vector<1x1x8x8xf32> to vector<8x8xf32>
    %37 = vector.shape_cast %34 : vector<8x8xf32> to vector<1x1x8x8xf32>
    tpu.vector_store %arg13[%c0_15, %c0_16, %c0_17, %c0_18], %37 {strides = array<i32>} : memref<8x1x8x8xf32, #tpu.memory_space<vmem>>, vector<1x1x8x8xf32>,
    %38 = arith.truncf %34 : vector<8x8xf32> to vector<8x8xbf16>
    %cst_19 = arith.constant dense<0.000000e+00> : vector<8x8xf32>
    %39 = tpu.matmul %38, %19, %cst_19 {dimension_numbers = #tpu.dot_dimension_numbers<[1], [0], [0], [1], [0, 0, 1, 1], [], []>} : vector<8x8xbf16>, vector<8x8xbf16>, vector<8x8xf32> -> vector<8x8xf32>
    %40 = vector.extract_strided_slice %11 {offsets = [0, 8], sizes = [8, 8], strides = [1, 1]} : vector<8x32xf32> to vector<8x8xf32>
    %41 = arith.truncf %40 : vector<8x8xf32> to vector<8x8xbf16>
    %42 = vector.extract_strided_slice %12 {offsets = [0, 8], sizes = [8, 8], strides = [1, 1]} : vector<8x32xf32> to vector<8x8xf32>
    %43 = arith.truncf %42 : vector<8x8xf32> to vector<8x8xbf16>
    %44 = vector.extract_strided_slice %13 {offsets = [0, 8], sizes = [8, 8], strides = [1, 1]} : vector<8x32xf32> to vector<8x8xf32>
    %45 = arith.truncf %44 : vector<8x8xf32> to vector<8x8xbf16>
    %cst_20 = arith.constant dense<0.000000e+00> : vector<8x8xf32>
    %46 = tpu.matmul %41, %43, %cst_20 {dimension_numbers = #tpu.dot_dimension_numbers<[1], [1], [0], [0], [0, 0, 1, 0], [], []>} : vector<8x8xbf16>, vector<8x8xbf16>, vector<8x8xf32> -> vector<8x8xf32>
    %cst_21 = arith.constant 0.353553385 : f32
    %47 = vector.broadcast %cst_21 : f32 to vector<8x8xf32>
    %48 = arith.mulf %46, %47 : vector<8x8xf32>
    %49 = vector.broadcast %6 : vector<1x8xf32> to vector<8x8xf32>
    %50 = arith.addf %48, %49 : vector<8x8xf32>
    %cst_22 = arith.constant dense<0xFF800000> : vector<8xf32>
    %51 = vector.multi_reduction <maximumf>, %50, %cst_22 [1] : vector<8x8xf32> to vector<8xf32>
    %52 = vector.shape_cast %51 : vector<8xf32> to vector<8x1xf32>
    %53 = vector.broadcast %52 : vector<8x1xf32> to vector<8x8xf32>
    %54 = arith.subf %50, %53 : vector<8x8xf32>
    %55 = math.exp %54 : vector<8x8xf32>
    %cst_23 = arith.constant dense<0.000000e+00> : vector<8xf32>
    %56 = vector.multi_reduction <add>, %55, %cst_23 [1] : vector<8x8xf32> to vector<8xf32>
    %57 = vector.shape_cast %56 : vector<8xf32> to vector<8x1xf32>
    %58 = tpu.reciprocal %57 {approx = true} : vector<8x1xf32> -> vector<8x1xf32>
    %59 = vector.broadcast %58 : vector<8x1xf32> to vector<8x8xf32>
    %60 = arith.mulf %55, %59 : vector<8x8xf32>
    %c1 = arith.constant 1 : index
    %c0_24 = arith.constant 0 : index
    %c0_25 = arith.constant 0 : index
    %c0_26 = arith.constant 0 : index
    %61 = vector.load %arg13[%c1, %c0_24, %c0_25, %c0_26] : memref<8x1x8x8xf32, #tpu.memory_space<vmem>>, vector<1x1x8x8xf32>
    %62 = vector.shape_cast %61 : vector<1x1x8x8xf32> to vector<8x8xf32>
    %63 = vector.shape_cast %60 : vector<8x8xf32> to vector<1x1x8x8xf32>
    tpu.vector_store %arg13[%c1, %c0_24, %c0_25, %c0_26], %63 {strides = array<i32>} : memref<8x1x8x8xf32, #tpu.memory_space<vmem>>, vector<1x1x8x8xf32>,
    %64 = arith.truncf %60 : vector<8x8xf32> to vector<8x8xbf16>
    %cst_27 = arith.constant dense<0.000000e+00> : vector<8x8xf32>
    %65 = tpu.matmul %64, %45, %cst_27 {dimension_numbers = #tpu.dot_dimension_numbers<[1], [0], [0], [1], [0, 0, 1, 1], [], []>} : vector<8x8xbf16>, vector<8x8xbf16>, vector<8x8xf32> -> vector<8x8xf32>
    %66 = vector.extract_strided_slice %11 {offsets = [0, 16], sizes = [8, 8], strides = [1, 1]} : vector<8x32xf32> to vector<8x8xf32>
    %67 = arith.truncf %66 : vector<8x8xf32> to vector<8x8xbf16>
    %68 = vector.extract_strided_slice %12 {offsets = [0, 16], sizes = [8, 8], strides = [1, 1]} : vector<8x32xf32> to vector<8x8xf32>
    %69 = arith.truncf %68 : vector<8x8xf32> to vector<8x8xbf16>
    %70 = vector.extract_strided_slice %13 {offsets = [0, 16], sizes = [8, 8], strides = [1, 1]} : vector<8x32xf32> to vector<8x8xf32>
    %71 = arith.truncf %70 : vector<8x8xf32> to vector<8x8xbf16>
    %cst_28 = arith.constant dense<0.000000e+00> : vector<8x8xf32>
    %72 = tpu.matmul %67, %69, %cst_28 {dimension_numbers = #tpu.dot_dimension_numbers<[1], [1], [0], [0], [0, 0, 1, 0], [], []>} : vector<8x8xbf16>, vector<8x8xbf16>, vector<8x8xf32> -> vector<8x8xf32>
    %cst_29 = arith.constant 0.353553385 : f32
    %73 = vector.broadcast %cst_29 : f32 to vector<8x8xf32>
    %74 = arith.mulf %72, %73 : vector<8x8xf32>
    %75 = vector.broadcast %6 : vector<1x8xf32> to vector<8x8xf32>
    %76 = arith.addf %74, %75 : vector<8x8xf32>
    %cst_30 = arith.constant dense<0xFF800000> : vector<8xf32>
    %77 = vector.multi_reduction <maximumf>, %76, %cst_30 [1] : vector<8x8xf32> to vector<8xf32>
    %78 = vector.shape_cast %77 : vector<8xf32> to vector<8x1xf32>
    %79 = vector.broadcast %78 : vector<8x1xf32> to vector<8x8xf32>
    %80 = arith.subf %76, %79 : vector<8x8xf32>
    %81 = math.exp %80 : vector<8x8xf32>
    %cst_31 = arith.constant dense<0.000000e+00> : vector<8xf32>
    %82 = vector.multi_reduction <add>, %81, %cst_31 [1] : vector<8x8xf32> to vector<8xf32>
    %83 = vector.shape_cast %82 : vector<8xf32> to vector<8x1xf32>
    %84 = tpu.reciprocal %83 {approx = true} : vector<8x1xf32> -> vector<8x1xf32>
    %85 = vector.broadcast %84 : vector<8x1xf32> to vector<8x8xf32>
    %86 = arith.mulf %81, %85 : vector<8x8xf32>
    %c2 = arith.constant 2 : index
    %c0_32 = arith.constant 0 : index
    %c0_33 = arith.constant 0 : index
    %c0_34 = arith.constant 0 : index
    %87 = vector.load %arg13[%c2, %c0_32, %c0_33, %c0_34] : memref<8x1x8x8xf32, #tpu.memory_space<vmem>>, vector<1x1x8x8xf32>
    %88 = vector.shape_cast %87 : vector<1x1x8x8xf32> to vector<8x8xf32>
    %89 = vector.shape_cast %86 : vector<8x8xf32> to vector<1x1x8x8xf32>
    tpu.vector_store %arg13[%c2, %c0_32, %c0_33, %c0_34], %89 {strides = array<i32>} : memref<8x1x8x8xf32, #tpu.memory_space<vmem>>, vector<1x1x8x8xf32>,
    %90 = arith.truncf %86 : vector<8x8xf32> to vector<8x8xbf16>
    %cst_35 = arith.constant dense<0.000000e+00> : vector<8x8xf32>
    %91 = tpu.matmul %90, %71, %cst_35 {dimension_numbers = #tpu.dot_dimension_numbers<[1], [0], [0], [1], [0, 0, 1, 1], [], []>} : vector<8x8xbf16>, vector<8x8xbf16>, vector<8x8xf32> -> vector<8x8xf32>
    %92 = vector.extract_strided_slice %11 {offsets = [0, 24], sizes = [8, 8], strides = [1, 1]} : vector<8x32xf32> to vector<8x8xf32>
    %93 = arith.truncf %92 : vector<8x8xf32> to vector<8x8xbf16>
    %94 = vector.extract_strided_slice %12 {offsets = [0, 24], sizes = [8, 8], strides = [1, 1]} : vector<8x32xf32> to vector<8x8xf32>
    %95 = arith.truncf %94 : vector<8x8xf32> to vector<8x8xbf16>
    %96 = vector.extract_strided_slice %13 {offsets = [0, 24], sizes = [8, 8], strides = [1, 1]} : vector<8x32xf32> to vector<8x8xf32>
    %97 = arith.truncf %96 : vector<8x8xf32> to vector<8x8xbf16>
    %cst_36 = arith.constant dense<0.000000e+00> : vector<8x8xf32>
    %98 = tpu.matmul %93, %95, %cst_36 {dimension_numbers = #tpu.dot_dimension_numbers<[1], [1], [0], [0], [0, 0, 1, 0], [], []>} : vector<8x8xbf16>, vector<8x8xbf16>, vector<8x8xf32> -> vector<8x8xf32>
    %cst_37 = arith.constant 0.353553385 : f32
    %99 = vector.broadcast %cst_37 : f32 to vector<8x8xf32>
    %100 = arith.mulf %98, %99 : vector<8x8xf32>
    %101 = vector.broadcast %6 : vector<1x8xf32> to vector<8x8xf32>
    %102 = arith.addf %100, %101 : vector<8x8xf32>
    %cst_38 = arith.constant dense<0xFF800000> : vector<8xf32>
    %103 = vector.multi_reduction <maximumf>, %102, %cst_38 [1] : vector<8x8xf32> to vector<8xf32>
    %104 = vector.shape_cast %103 : vector<8xf32> to vector<8x1xf32>
    %105 = vector.broadcast %104 : vector<8x1xf32> to vector<8x8xf32>
    %106 = arith.subf %102, %105 : vector<8x8xf32>
    %107 = math.exp %106 : vector<8x8xf32>
    %cst_39 = arith.constant dense<0.000000e+00> : vector<8xf32>
    %108 = vector.multi_reduction <add>, %107, %cst_39 [1] : vector<8x8xf32> to vector<8xf32>
    %109 = vector.shape_cast %108 : vector<8xf32> to vector<8x1xf32>
    %110 = tpu.reciprocal %109 {approx = true} : vector<8x1xf32> -> vector<8x1xf32>
    %111 = vector.broadcast %110 : vector<8x1xf32> to vector<8x8xf32>
    %112 = arith.mulf %107, %111 : vector<8x8xf32>
    %c3 = arith.constant 3 : index
    %c0_40 = arith.constant 0 : index
    %c0_41 = arith.constant 0 : index
    %c0_42 = arith.constant 0 : index
    %113 = vector.load %arg13[%c3, %c0_40, %c0_41, %c0_42] : memref<8x1x8x8xf32, #tpu.memory_space<vmem>>, vector<1x1x8x8xf32>
    %114 = vector.shape_cast %113 : vector<1x1x8x8xf32> to vector<8x8xf32>
    %115 = vector.shape_cast %112 : vector<8x8xf32> to vector<1x1x8x8xf32>
    tpu.vector_store %arg13[%c3, %c0_40, %c0_41, %c0_42], %115 {strides = array<i32>} : memref<8x1x8x8xf32, #tpu.memory_space<vmem>>, vector<1x1x8x8xf32>,
    %116 = arith.truncf %112 : vector<8x8xf32> to vector<8x8xbf16>
    %cst_43 = arith.constant dense<0.000000e+00> : vector<8x8xf32>
    %117 = tpu.matmul %116, %97, %cst_43 {dimension_numbers = #tpu.dot_dimension_numbers<[1], [0], [0], [1], [0, 0, 1, 1], [], []>} : vector<8x8xbf16>, vector<8x8xbf16>, vector<8x8xf32> -> vector<8x8xf32>
    %118 = tpu.concatenate %39, %65, %91, %117 in 1 : vector<8x8xf32>, vector<8x8xf32>, vector<8x8xf32>, vector<8x8xf32> -> vector<8x32xf32>
    %119 = arith.truncf %118 : vector<8x32xf32> to vector<8x32xbf16>
    %c0_44 = arith.constant 0 : index
    %c0_45 = arith.constant 0 : index
    %c0_46 = arith.constant 0 : index
    %120 = vector.load %arg5[%c0_44, %c0_45, %c0_46] : memref<2x32x32xbf16, #tpu.memory_space<vmem>>, vector<1x32x32xbf16>
    %121 = vector.shape_cast %120 : vector<1x32x32xbf16> to vector<32x32xbf16>
    %cst_47 = arith.constant dense<0.000000e+00> : vector<8x32xf32>
    %122 = tpu.matmul %119, %121, %cst_47 {dimension_numbers = #tpu.dot_dimension_numbers<[1], [0], [0], [1], [0, 0, 1, 1], [], []>} : vector<8x32xbf16>, vector<32x32xbf16>, vector<8x32xf32> -> vector<8x32xf32>
    %123 = arith.addf %122, %4 : vector<8x32xf32>
    %c0_48 = arith.constant 0 : index
    %c0_49 = arith.constant 0 : index
    %c0_50 = arith.constant 0 : index
    %124 = vector.load %arg6[%c0_48, %c0_49, %c0_50] : memref<2x1x32xf32, #tpu.memory_space<vmem>>, vector<1x1x32xf32>
    %125 = vector.shape_cast %124 : vector<1x1x32xf32> to vector<1x32xf32>
    %c0_51 = arith.constant 0 : index
    %c0_52 = arith.constant 0 : index
    %c0_53 = arith.constant 0 : index
    %126 = vector.load %arg7[%c0_51, %c0_52, %c0_53] : memref<2x1x32xf32, #tpu.memory_space<vmem>>, vector<1x1x32xf32>
    %127 = vector.shape_cast %126 : vector<1x1x32xf32> to vector<1x32xf32>
    %cst_54 = arith.constant dense<0.000000e+00> : vector<8xf32>
    %128 = vector.multi_reduction <add>, %123, %cst_54 [1] : vector<8x32xf32> to vector<8xf32>
    %129 = vector.shape_cast %128 : vector<8xf32> to vector<8x1xf32>
    %cst_55 = arith.constant 3.200000e+01 : f32
    %130 = vector.broadcast %cst_55 : f32 to vector<8x1xf32>
    %131 = arith.divf %129, %130 : vector<8x1xf32>
    %132 = vector.broadcast %131 : vector<8x1xf32> to vector<8x32xf32>
    %133 = arith.subf %123, %132 : vector<8x32xf32>
    %134 = arith.mulf %133, %133 : vector<8x32xf32>
    %cst_56 = arith.constant dense<0.000000e+00> : vector<8xf32>
    %135 = vector.multi_reduction <add>, %134, %cst_56 [1] : vector<8x32xf32> to vector<8xf32>
    %136 = vector.shape_cast %135 : vector<8xf32> to vector<8x1xf32>
    %cst_57 = arith.constant 3.200000e+01 : f32
    %137 = vector.broadcast %cst_57 : f32 to vector<8x1xf32>
    %138 = arith.divf %136, %137 : vector<8x1xf32>
    %cst_58 = arith.constant 9.99999974E-6 : f32
    %139 = vector.broadcast %cst_58 : f32 to vector<8x1xf32>
    %140 = arith.addf %138, %139 : vector<8x1xf32>
    %141 = math.rsqrt %140 : vector<8x1xf32>
    %142 = vector.broadcast %141 : vector<8x1xf32> to vector<8x32xf32>
    %143 = arith.mulf %133, %142 : vector<8x32xf32>
    %144 = vector.broadcast %125 : vector<1x32xf32> to vector<8x32xf32>
    %145 = arith.mulf %143, %144 : vector<8x32xf32>
    %146 = vector.broadcast %127 : vector<1x32xf32> to vector<8x32xf32>
    %147 = arith.addf %145, %146 : vector<8x32xf32>
    %148 = arith.truncf %147 : vector<8x32xf32> to vector<8x32xbf16>
    %c0_59 = arith.constant 0 : index
    %c0_60 = arith.constant 0 : index
    %c0_61 = arith.constant 0 : index
    %149 = vector.load %arg8[%c0_59, %c0_60, %c0_61] : memref<2x32x64xbf16, #tpu.memory_space<vmem>>, vector<1x32x64xbf16>
    %150 = vector.shape_cast %149 : vector<1x32x64xbf16> to vector<32x64xbf16>
    %cst_62 = arith.constant dense<0.000000e+00> : vector<8x64xf32>
    %151 = tpu.matmul %148, %150, %cst_62 {dimension_numbers = #tpu.dot_dimension_numbers<[1], [0], [0], [1], [0, 0, 1, 1], [], []>} : vector<8x32xbf16>, vector<32x64xbf16>, vector<8x64xf32> -> vector<8x64xf32>
    %cst_63 = arith.constant 0.000000e+00 : f32
    %152 = vector.broadcast %cst_63 : f32 to vector<8x64xf32>
    %153 = arith.maximumf %151, %152 : vector<8x64xf32>
    %154 = arith.truncf %153 : vector<8x64xf32> to vector<8x64xbf16>
    %c0_64 = arith.constant 0 : index
    %c0_65 = arith.constant 0 : index
    %c0_66 = arith.constant 0 : index
    %155 = vector.load %arg9[%c0_64, %c0_65, %c0_66] : memref<2x64x32xbf16, #tpu.memory_space<vmem>>, vector<1x64x32xbf16>
    %156 = vector.shape_cast %155 : vector<1x64x32xbf16> to vector<64x32xbf16>
    %cst_67 = arith.constant dense<0.000000e+00> : vector<8x32xf32>
    %157 = tpu.matmul %154, %156, %cst_67 {dimension_numbers = #tpu.dot_dimension_numbers<[1], [0], [0], [1], [0, 0, 1, 1], [], []>} : vector<8x64xbf16>, vector<64x32xbf16>, vector<8x32xf32> -> vector<8x32xf32>
    %158 = arith.addf %157, %147 : vector<8x32xf32>
    %c0_68 = arith.constant 0 : index
    %c0_69 = arith.constant 0 : index
    %c0_70 = arith.constant 0 : index
    %159 = vector.load %arg10[%c0_68, %c0_69, %c0_70] : memref<2x1x32xf32, #tpu.memory_space<vmem>>, vector<1x1x32xf32>
    %160 = vector.shape_cast %159 : vector<1x1x32xf32> to vector<1x32xf32>
    %c0_71 = arith.constant 0 : index
    %c0_72 = arith.constant 0 : index
    %c0_73 = arith.constant 0 : index
    %161 = vector.load %arg11[%c0_71, %c0_72, %c0_73] : memref<2x1x32xf32, #tpu.memory_space<vmem>>, vector<1x1x32xf32>
    %162 = vector.shape_cast %161 : vector<1x1x32xf32> to vector<1x32xf32>
    %cst_74 = arith.constant dense<0.000000e+00> : vector<8xf32>
    %163 = vector.multi_reduction <add>, %158, %cst_74 [1] : vector<8x32xf32> to vector<8xf32>
    %164 = vector.shape_cast %163 : vector<8xf32> to vector<8x1xf32>
    %cst_75 = arith.constant 3.200000e+01 : f32
    %165 = vector.broadcast %cst_75 : f32 to vector<8x1xf32>
    %166 = arith.divf %164, %165 : vector<8x1xf32>
    %167 = vector.broadcast %166 : vector<8x1xf32> to vector<8x32xf32>
    %168 = arith.subf %158, %167 : vector<8x32xf32>
    %169 = arith.mulf %168, %168 : vector<8x32xf32>
    %cst_76 = arith.constant dense<0.000000e+00> : vector<8xf32>
    %170 = vector.multi_reduction <add>, %169, %cst_76 [1] : vector<8x32xf32> to vector<8xf32>
    %171 = vector.shape_cast %170 : vector<8xf32> to vector<8x1xf32>
    %cst_77 = arith.constant 3.200000e+01 : f32
    %172 = vector.broadcast %cst_77 : f32 to vector<8x1xf32>
    %173 = arith.divf %171, %172 : vector<8x1xf32>
    %cst_78 = arith.constant 9.99999974E-6 : f32
    %174 = vector.broadcast %cst_78 : f32 to vector<8x1xf32>
    %175 = arith.addf %173, %174 : vector<8x1xf32>
    %176 = math.rsqrt %175 : vector<8x1xf32>
    %177 = vector.broadcast %176 : vector<8x1xf32> to vector<8x32xf32>
    %178 = arith.mulf %168, %177 : vector<8x32xf32>
    %179 = vector.broadcast %160 : vector<1x32xf32> to vector<8x32xf32>
    %180 = arith.mulf %178, %179 : vector<8x32xf32>
    %181 = vector.broadcast %162 : vector<1x32xf32> to vector<8x32xf32>
    %182 = arith.addf %180, %181 : vector<8x32xf32>
    %183 = arith.truncf %182 : vector<8x32xf32> to vector<8x32xbf16>
    %c1_79 = arith.constant 1 : index
    %c0_80 = arith.constant 0 : index
    %c0_81 = arith.constant 0 : index
    %184 = vector.load %arg4[%c1_79, %c0_80, %c0_81] : memref<2x32x96xbf16, #tpu.memory_space<vmem>>, vector<1x32x96xbf16>
    %185 = vector.shape_cast %184 : vector<1x32x96xbf16> to vector<32x96xbf16>
    %cst_82 = arith.constant dense<0.000000e+00> : vector<8x96xf32>
    %186 = tpu.matmul %183, %185, %cst_82 {dimension_numbers = #tpu.dot_dimension_numbers<[1], [0], [0], [1], [0, 0, 1, 1], [], []>} : vector<8x32xbf16>, vector<32x96xbf16>, vector<8x96xf32> -> vector<8x96xf32>
    %187 = vector.extract_strided_slice %186 {offsets = [0, 0], sizes = [8, 32], strides = [1, 1]} : vector<8x96xf32> to vector<8x32xf32>
    %188 = vector.extract_strided_slice %186 {offsets = [0, 32], sizes = [8, 32], strides = [1, 1]} : vector<8x96xf32> to vector<8x32xf32>
    %189 = vector.extract_strided_slice %186 {offsets = [0, 64], sizes = [8, 32], strides = [1, 1]} : vector<8x96xf32> to vector<8x32xf32>
    %190 = vector.extract_strided_slice %187 {offsets = [0, 0], sizes = [8, 8], strides = [1, 1]} : vector<8x32xf32> to vector<8x8xf32>
    %191 = arith.truncf %190 : vector<8x8xf32> to vector<8x8xbf16>
    %192 = vector.extract_strided_slice %188 {offsets = [0, 0], sizes = [8, 8], strides = [1, 1]} : vector<8x32xf32> to vector<8x8xf32>
    %193 = arith.truncf %192 : vector<8x8xf32> to vector<8x8xbf16>
    %194 = vector.extract_strided_slice %189 {offsets = [0, 0], sizes = [8, 8], strides = [1, 1]} : vector<8x32xf32> to vector<8x8xf32>
    %195 = arith.truncf %194 : vector<8x8xf32> to vector<8x8xbf16>
    %cst_83 = arith.constant dense<0.000000e+00> : vector<8x8xf32>
    %196 = tpu.matmul %191, %193, %cst_83 {dimension_numbers = #tpu.dot_dimension_numbers<[1], [1], [0], [0], [0, 0, 1, 0], [], []>} : vector<8x8xbf16>, vector<8x8xbf16>, vector<8x8xf32> -> vector<8x8xf32>
    %cst_84 = arith.constant 0.353553385 : f32
    %197 = vector.broadcast %cst_84 : f32 to vector<8x8xf32>
    %198 = arith.mulf %196, %197 : vector<8x8xf32>
    %199 = vector.broadcast %6 : vector<1x8xf32> to vector<8x8xf32>
    %200 = arith.addf %198, %199 : vector<8x8xf32>
    %cst_85 = arith.constant dense<0xFF800000> : vector<8xf32>
    %201 = vector.multi_reduction <maximumf>, %200, %cst_85 [1] : vector<8x8xf32> to vector<8xf32>
    %202 = vector.shape_cast %201 : vector<8xf32> to vector<8x1xf32>
    %203 = vector.broadcast %202 : vector<8x1xf32> to vector<8x8xf32>
    %204 = arith.subf %200, %203 : vector<8x8xf32>
    %205 = math.exp %204 : vector<8x8xf32>
    %cst_86 = arith.constant dense<0.000000e+00> : vector<8xf32>
    %206 = vector.multi_reduction <add>, %205, %cst_86 [1] : vector<8x8xf32> to vector<8xf32>
    %207 = vector.shape_cast %206 : vector<8xf32> to vector<8x1xf32>
    %208 = tpu.reciprocal %207 {approx = true} : vector<8x1xf32> -> vector<8x1xf32>
    %209 = vector.broadcast %208 : vector<8x1xf32> to vector<8x8xf32>
    %210 = arith.mulf %205, %209 : vector<8x8xf32>
    %c4 = arith.constant 4 : index
    %c0_87 = arith.constant 0 : index
    %c0_88 = arith.constant 0 : index
    %c0_89 = arith.constant 0 : index
    %211 = vector.load %arg13[%c4, %c0_87, %c0_88, %c0_89] : memref<8x1x8x8xf32, #tpu.memory_space<vmem>>, vector<1x1x8x8xf32>
    %212 = vector.shape_cast %211 : vector<1x1x8x8xf32> to vector<8x8xf32>
    %213 = vector.shape_cast %210 : vector<8x8xf32> to vector<1x1x8x8xf32>
    tpu.vector_store %arg13[%c4, %c0_87, %c0_88, %c0_89], %213 {strides = array<i32>} : memref<8x1x8x8xf32, #tpu.memory_space<vmem>>, vector<1x1x8x8xf32>,
    %214 = arith.truncf %210 : vector<8x8xf32> to vector<8x8xbf16>
    %cst_90 = arith.constant dense<0.000000e+00> : vector<8x8xf32>
    %215 = tpu.matmul %214, %195, %cst_90 {dimension_numbers = #tpu.dot_dimension_numbers<[1], [0], [0], [1], [0, 0, 1, 1], [], []>} : vector<8x8xbf16>, vector<8x8xbf16>, vector<8x8xf32> -> vector<8x8xf32>
    %216 = vector.extract_strided_slice %187 {offsets = [0, 8], sizes = [8, 8], strides = [1, 1]} : vector<8x32xf32> to vector<8x8xf32>
    %217 = arith.truncf %216 : vector<8x8xf32> to vector<8x8xbf16>
    %218 = vector.extract_strided_slice %188 {offsets = [0, 8], sizes = [8, 8], strides = [1, 1]} : vector<8x32xf32> to vector<8x8xf32>
    %219 = arith.truncf %218 : vector<8x8xf32> to vector<8x8xbf16>
    %220 = vector.extract_strided_slice %189 {offsets = [0, 8], sizes = [8, 8], strides = [1, 1]} : vector<8x32xf32> to vector<8x8xf32>
    %221 = arith.truncf %220 : vector<8x8xf32> to vector<8x8xbf16>
    %cst_91 = arith.constant dense<0.000000e+00> : vector<8x8xf32>
    %222 = tpu.matmul %217, %219, %cst_91 {dimension_numbers = #tpu.dot_dimension_numbers<[1], [1], [0], [0], [0, 0, 1, 0], [], []>} : vector<8x8xbf16>, vector<8x8xbf16>, vector<8x8xf32> -> vector<8x8xf32>
    %cst_92 = arith.constant 0.353553385 : f32
    %223 = vector.broadcast %cst_92 : f32 to vector<8x8xf32>
    %224 = arith.mulf %222, %223 : vector<8x8xf32>
    %225 = vector.broadcast %6 : vector<1x8xf32> to vector<8x8xf32>
    %226 = arith.addf %224, %225 : vector<8x8xf32>
    %cst_93 = arith.constant dense<0xFF800000> : vector<8xf32>
    %227 = vector.multi_reduction <maximumf>, %226, %cst_93 [1] : vector<8x8xf32> to vector<8xf32>
    %228 = vector.shape_cast %227 : vector<8xf32> to vector<8x1xf32>
    %229 = vector.broadcast %228 : vector<8x1xf32> to vector<8x8xf32>
    %230 = arith.subf %226, %229 : vector<8x8xf32>
    %231 = math.exp %230 : vector<8x8xf32>
    %cst_94 = arith.constant dense<0.000000e+00> : vector<8xf32>
    %232 = vector.multi_reduction <add>, %231, %cst_94 [1] : vector<8x8xf32> to vector<8xf32>
    %233 = vector.shape_cast %232 : vector<8xf32> to vector<8x1xf32>
    %234 = tpu.reciprocal %233 {approx = true} : vector<8x1xf32> -> vector<8x1xf32>
    %235 = vector.broadcast %234 : vector<8x1xf32> to vector<8x8xf32>
    %236 = arith.mulf %231, %235 : vector<8x8xf32>
    %c5 = arith.constant 5 : index
    %c0_95 = arith.constant 0 : index
    %c0_96 = arith.constant 0 : index
    %c0_97 = arith.constant 0 : index
    %237 = vector.load %arg13[%c5, %c0_95, %c0_96, %c0_97] : memref<8x1x8x8xf32, #tpu.memory_space<vmem>>, vector<1x1x8x8xf32>
    %238 = vector.shape_cast %237 : vector<1x1x8x8xf32> to vector<8x8xf32>
    %239 = vector.shape_cast %236 : vector<8x8xf32> to vector<1x1x8x8xf32>
    tpu.vector_store %arg13[%c5, %c0_95, %c0_96, %c0_97], %239 {strides = array<i32>} : memref<8x1x8x8xf32, #tpu.memory_space<vmem>>, vector<1x1x8x8xf32>,
    %240 = arith.truncf %236 : vector<8x8xf32> to vector<8x8xbf16>
    %cst_98 = arith.constant dense<0.000000e+00> : vector<8x8xf32>
    %241 = tpu.matmul %240, %221, %cst_98 {dimension_numbers = #tpu.dot_dimension_numbers<[1], [0], [0], [1], [0, 0, 1, 1], [], []>} : vector<8x8xbf16>, vector<8x8xbf16>, vector<8x8xf32> -> vector<8x8xf32>
    %242 = vector.extract_strided_slice %187 {offsets = [0, 16], sizes = [8, 8], strides = [1, 1]} : vector<8x32xf32> to vector<8x8xf32>
    %243 = arith.truncf %242 : vector<8x8xf32> to vector<8x8xbf16>
    %244 = vector.extract_strided_slice %188 {offsets = [0, 16], sizes = [8, 8], strides = [1, 1]} : vector<8x32xf32> to vector<8x8xf32>
    %245 = arith.truncf %244 : vector<8x8xf32> to vector<8x8xbf16>
    %246 = vector.extract_strided_slice %189 {offsets = [0, 16], sizes = [8, 8], strides = [1, 1]} : vector<8x32xf32> to vector<8x8xf32>
    %247 = arith.truncf %246 : vector<8x8xf32> to vector<8x8xbf16>
    %cst_99 = arith.constant dense<0.000000e+00> : vector<8x8xf32>
    %248 = tpu.matmul %243, %245, %cst_99 {dimension_numbers = #tpu.dot_dimension_numbers<[1], [1], [0], [0], [0, 0, 1, 0], [], []>} : vector<8x8xbf16>, vector<8x8xbf16>, vector<8x8xf32> -> vector<8x8xf32>
    %cst_100 = arith.constant 0.353553385 : f32
    %249 = vector.broadcast %cst_100 : f32 to vector<8x8xf32>
    %250 = arith.mulf %248, %249 : vector<8x8xf32>
    %251 = vector.broadcast %6 : vector<1x8xf32> to vector<8x8xf32>
    %252 = arith.addf %250, %251 : vector<8x8xf32>
    %cst_101 = arith.constant dense<0xFF800000> : vector<8xf32>
    %253 = vector.multi_reduction <maximumf>, %252, %cst_101 [1] : vector<8x8xf32> to vector<8xf32>
    %254 = vector.shape_cast %253 : vector<8xf32> to vector<8x1xf32>
    %255 = vector.broadcast %254 : vector<8x1xf32> to vector<8x8xf32>
    %256 = arith.subf %252, %255 : vector<8x8xf32>
    %257 = math.exp %256 : vector<8x8xf32>
    %cst_102 = arith.constant dense<0.000000e+00> : vector<8xf32>
    %258 = vector.multi_reduction <add>, %257, %cst_102 [1] : vector<8x8xf32> to vector<8xf32>
    %259 = vector.shape_cast %258 : vector<8xf32> to vector<8x1xf32>
    %260 = tpu.reciprocal %259 {approx = true} : vector<8x1xf32> -> vector<8x1xf32>
    %261 = vector.broadcast %260 : vector<8x1xf32> to vector<8x8xf32>
    %262 = arith.mulf %257, %261 : vector<8x8xf32>
    %c6 = arith.constant 6 : index
    %c0_103 = arith.constant 0 : index
    %c0_104 = arith.constant 0 : index
    %c0_105 = arith.constant 0 : index
    %263 = vector.load %arg13[%c6, %c0_103, %c0_104, %c0_105] : memref<8x1x8x8xf32, #tpu.memory_space<vmem>>, vector<1x1x8x8xf32>
    %264 = vector.shape_cast %263 : vector<1x1x8x8xf32> to vector<8x8xf32>
    %265 = vector.shape_cast %262 : vector<8x8xf32> to vector<1x1x8x8xf32>
    tpu.vector_store %arg13[%c6, %c0_103, %c0_104, %c0_105], %265 {strides = array<i32>} : memref<8x1x8x8xf32, #tpu.memory_space<vmem>>, vector<1x1x8x8xf32>,
    %266 = arith.truncf %262 : vector<8x8xf32> to vector<8x8xbf16>
    %cst_106 = arith.constant dense<0.000000e+00> : vector<8x8xf32>
    %267 = tpu.matmul %266, %247, %cst_106 {dimension_numbers = #tpu.dot_dimension_numbers<[1], [0], [0], [1], [0, 0, 1, 1], [], []>} : vector<8x8xbf16>, vector<8x8xbf16>, vector<8x8xf32> -> vector<8x8xf32>
    %268 = vector.extract_strided_slice %187 {offsets = [0, 24], sizes = [8, 8], strides = [1, 1]} : vector<8x32xf32> to vector<8x8xf32>
    %269 = arith.truncf %268 : vector<8x8xf32> to vector<8x8xbf16>
    %270 = vector.extract_strided_slice %188 {offsets = [0, 24], sizes = [8, 8], strides = [1, 1]} : vector<8x32xf32> to vector<8x8xf32>
    %271 = arith.truncf %270 : vector<8x8xf32> to vector<8x8xbf16>
    %272 = vector.extract_strided_slice %189 {offsets = [0, 24], sizes = [8, 8], strides = [1, 1]} : vector<8x32xf32> to vector<8x8xf32>
    %273 = arith.truncf %272 : vector<8x8xf32> to vector<8x8xbf16>
    %cst_107 = arith.constant dense<0.000000e+00> : vector<8x8xf32>
    %274 = tpu.matmul %269, %271, %cst_107 {dimension_numbers = #tpu.dot_dimension_numbers<[1], [1], [0], [0], [0, 0, 1, 0], [], []>} : vector<8x8xbf16>, vector<8x8xbf16>, vector<8x8xf32> -> vector<8x8xf32>
    %cst_108 = arith.constant 0.353553385 : f32
    %275 = vector.broadcast %cst_108 : f32 to vector<8x8xf32>
    %276 = arith.mulf %274, %275 : vector<8x8xf32>
    %277 = vector.broadcast %6 : vector<1x8xf32> to vector<8x8xf32>
    %278 = arith.addf %276, %277 : vector<8x8xf32>
    %cst_109 = arith.constant dense<0xFF800000> : vector<8xf32>
    %279 = vector.multi_reduction <maximumf>, %278, %cst_109 [1] : vector<8x8xf32> to vector<8xf32>
    %280 = vector.shape_cast %279 : vector<8xf32> to vector<8x1xf32>
    %281 = vector.broadcast %280 : vector<8x1xf32> to vector<8x8xf32>
    %282 = arith.subf %278, %281 : vector<8x8xf32>
    %283 = math.exp %282 : vector<8x8xf32>
    %cst_110 = arith.constant dense<0.000000e+00> : vector<8xf32>
    %284 = vector.multi_reduction <add>, %283, %cst_110 [1] : vector<8x8xf32> to vector<8xf32>
    %285 = vector.shape_cast %284 : vector<8xf32> to vector<8x1xf32>
    %286 = tpu.reciprocal %285 {approx = true} : vector<8x1xf32> -> vector<8x1xf32>
    %287 = vector.broadcast %286 : vector<8x1xf32> to vector<8x8xf32>
    %288 = arith.mulf %283, %287 : vector<8x8xf32>
    %c7 = arith.constant 7 : index
    %c0_111 = arith.constant 0 : index
    %c0_112 = arith.constant 0 : index
    %c0_113 = arith.constant 0 : index
    %289 = vector.load %arg13[%c7, %c0_111, %c0_112, %c0_113] : memref<8x1x8x8xf32, #tpu.memory_space<vmem>>, vector<1x1x8x8xf32>
    %290 = vector.shape_cast %289 : vector<1x1x8x8xf32> to vector<8x8xf32>
    %291 = vector.shape_cast %288 : vector<8x8xf32> to vector<1x1x8x8xf32>
    tpu.vector_store %arg13[%c7, %c0_111, %c0_112, %c0_113], %291 {strides = array<i32>} : memref<8x1x8x8xf32, #tpu.memory_space<vmem>>, vector<1x1x8x8xf32>,
    %292 = arith.truncf %288 : vector<8x8xf32> to vector<8x8xbf16>
    %cst_114 = arith.constant dense<0.000000e+00> : vector<8x8xf32>
    %293 = tpu.matmul %292, %273, %cst_114 {dimension_numbers = #tpu.dot_dimension_numbers<[1], [0], [0], [1], [0, 0, 1, 1], [], []>} : vector<8x8xbf16>, vector<8x8xbf16>, vector<8x8xf32> -> vector<8x8xf32>
    %294 = tpu.concatenate %215, %241, %267, %293 in 1 : vector<8x8xf32>, vector<8x8xf32>, vector<8x8xf32>, vector<8x8xf32> -> vector<8x32xf32>
    %295 = arith.truncf %294 : vector<8x32xf32> to vector<8x32xbf16>
    %c1_115 = arith.constant 1 : index
    %c0_116 = arith.constant 0 : index
    %c0_117 = arith.constant 0 : index
    %296 = vector.load %arg5[%c1_115, %c0_116, %c0_117] : memref<2x32x32xbf16, #tpu.memory_space<vmem>>, vector<1x32x32xbf16>
    %297 = vector.shape_cast %296 : vector<1x32x32xbf16> to vector<32x32xbf16>
    %cst_118 = arith.constant dense<0.000000e+00> : vector<8x32xf32>
    %298 = tpu.matmul %295, %297, %cst_118 {dimension_numbers = #tpu.dot_dimension_numbers<[1], [0], [0], [1], [0, 0, 1, 1], [], []>} : vector<8x32xbf16>, vector<32x32xbf16>, vector<8x32xf32> -> vector<8x32xf32>
    %299 = arith.addf %298, %182 : vector<8x32xf32>
    %c1_119 = arith.constant 1 : index
    %c0_120 = arith.constant 0 : index
    %c0_121 = arith.constant 0 : index
    %300 = vector.load %arg6[%c1_119, %c0_120, %c0_121] : memref<2x1x32xf32, #tpu.memory_space<vmem>>, vector<1x1x32xf32>
    %301 = vector.shape_cast %300 : vector<1x1x32xf32> to vector<1x32xf32>
    %c1_122 = arith.constant 1 : index
    %c0_123 = arith.constant 0 : index
    %c0_124 = arith.constant 0 : index
    %302 = vector.load %arg7[%c1_122, %c0_123, %c0_124] : memref<2x1x32xf32, #tpu.memory_space<vmem>>, vector<1x1x32xf32>
    %303 = vector.shape_cast %302 : vector<1x1x32xf32> to vector<1x32xf32>
    %cst_125 = arith.constant dense<0.000000e+00> : vector<8xf32>
    %304 = vector.multi_reduction <add>, %299, %cst_125 [1] : vector<8x32xf32> to vector<8xf32>
    %305 = vector.shape_cast %304 : vector<8xf32> to vector<8x1xf32>
    %cst_126 = arith.constant 3.200000e+01 : f32
    %306 = vector.broadcast %cst_126 : f32 to vector<8x1xf32>
    %307 = arith.divf %305, %306 : vector<8x1xf32>
    %308 = vector.broadcast %307 : vector<8x1xf32> to vector<8x32xf32>
    %309 = arith.subf %299, %308 : vector<8x32xf32>
    %310 = arith.mulf %309, %309 : vector<8x32xf32>
    %cst_127 = arith.constant dense<0.000000e+00> : vector<8xf32>
    %311 = vector.multi_reduction <add>, %310, %cst_127 [1] : vector<8x32xf32> to vector<8xf32>
    %312 = vector.shape_cast %311 : vector<8xf32> to vector<8x1xf32>
    %cst_128 = arith.constant 3.200000e+01 : f32
    %313 = vector.broadcast %cst_128 : f32 to vector<8x1xf32>
    %314 = arith.divf %312, %313 : vector<8x1xf32>
    %cst_129 = arith.constant 9.99999974E-6 : f32
    %315 = vector.broadcast %cst_129 : f32 to vector<8x1xf32>
    %316 = arith.addf %314, %315 : vector<8x1xf32>
    %317 = math.rsqrt %316 : vector<8x1xf32>
    %318 = vector.broadcast %317 : vector<8x1xf32> to vector<8x32xf32>
    %319 = arith.mulf %309, %318 : vector<8x32xf32>
    %320 = vector.broadcast %301 : vector<1x32xf32> to vector<8x32xf32>
    %321 = arith.mulf %319, %320 : vector<8x32xf32>
    %322 = vector.broadcast %303 : vector<1x32xf32> to vector<8x32xf32>
    %323 = arith.addf %321, %322 : vector<8x32xf32>
    %324 = arith.truncf %323 : vector<8x32xf32> to vector<8x32xbf16>
    %c1_130 = arith.constant 1 : index
    %c0_131 = arith.constant 0 : index
    %c0_132 = arith.constant 0 : index
    %325 = vector.load %arg8[%c1_130, %c0_131, %c0_132] : memref<2x32x64xbf16, #tpu.memory_space<vmem>>, vector<1x32x64xbf16>
    %326 = vector.shape_cast %325 : vector<1x32x64xbf16> to vector<32x64xbf16>
    %cst_133 = arith.constant dense<0.000000e+00> : vector<8x64xf32>
    %327 = tpu.matmul %324, %326, %cst_133 {dimension_numbers = #tpu.dot_dimension_numbers<[1], [0], [0], [1], [0, 0, 1, 1], [], []>} : vector<8x32xbf16>, vector<32x64xbf16>, vector<8x64xf32> -> vector<8x64xf32>
    %cst_134 = arith.constant 0.000000e+00 : f32
    %328 = vector.broadcast %cst_134 : f32 to vector<8x64xf32>
    %329 = arith.maximumf %327, %328 : vector<8x64xf32>
    %330 = arith.truncf %329 : vector<8x64xf32> to vector<8x64xbf16>
    %c1_135 = arith.constant 1 : index
    %c0_136 = arith.constant 0 : index
    %c0_137 = arith.constant 0 : index
    %331 = vector.load %arg9[%c1_135, %c0_136, %c0_137] : memref<2x64x32xbf16, #tpu.memory_space<vmem>>, vector<1x64x32xbf16>
    %332 = vector.shape_cast %331 : vector<1x64x32xbf16> to vector<64x32xbf16>
    %cst_138 = arith.constant dense<0.000000e+00> : vector<8x32xf32>
    %333 = tpu.matmul %330, %332, %cst_138 {dimension_numbers = #tpu.dot_dimension_numbers<[1], [0], [0], [1], [0, 0, 1, 1], [], []>} : vector<8x64xbf16>, vector<64x32xbf16>, vector<8x32xf32> -> vector<8x32xf32>
    %334 = arith.addf %333, %323 : vector<8x32xf32>
    %c1_139 = arith.constant 1 : index
    %c0_140 = arith.constant 0 : index
    %c0_141 = arith.constant 0 : index
    %335 = vector.load %arg10[%c1_139, %c0_140, %c0_141] : memref<2x1x32xf32, #tpu.memory_space<vmem>>, vector<1x1x32xf32>
    %336 = vector.shape_cast %335 : vector<1x1x32xf32> to vector<1x32xf32>
    %c1_142 = arith.constant 1 : index
    %c0_143 = arith.constant 0 : index
    %c0_144 = arith.constant 0 : index
    %337 = vector.load %arg11[%c1_142, %c0_143, %c0_144] : memref<2x1x32xf32, #tpu.memory_space<vmem>>, vector<1x1x32xf32>
    %338 = vector.shape_cast %337 : vector<1x1x32xf32> to vector<1x32xf32>
    %cst_145 = arith.constant dense<0.000000e+00> : vector<8xf32>
    %339 = vector.multi_reduction <add>, %334, %cst_145 [1] : vector<8x32xf32> to vector<8xf32>
    %340 = vector.shape_cast %339 : vector<8xf32> to vector<8x1xf32>
    %cst_146 = arith.constant 3.200000e+01 : f32
    %341 = vector.broadcast %cst_146 : f32 to vector<8x1xf32>
    %342 = arith.divf %340, %341 : vector<8x1xf32>
    %343 = vector.broadcast %342 : vector<8x1xf32> to vector<8x32xf32>
    %344 = arith.subf %334, %343 : vector<8x32xf32>
    %345 = arith.mulf %344, %344 : vector<8x32xf32>
    %cst_147 = arith.constant dense<0.000000e+00> : vector<8xf32>
    %346 = vector.multi_reduction <add>, %345, %cst_147 [1] : vector<8x32xf32> to vector<8xf32>
    %347 = vector.shape_cast %346 : vector<8xf32> to vector<8x1xf32>
    %cst_148 = arith.constant 3.200000e+01 : f32
    %348 = vector.broadcast %cst_148 : f32 to vector<8x1xf32>
    %349 = arith.divf %347, %348 : vector<8x1xf32>
    %cst_149 = arith.constant 9.99999974E-6 : f32
    %350 = vector.broadcast %cst_149 : f32 to vector<8x1xf32>
    %351 = arith.addf %349, %350 : vector<8x1xf32>
    %352 = math.rsqrt %351 : vector<8x1xf32>
    %353 = vector.broadcast %352 : vector<8x1xf32> to vector<8x32xf32>
    %354 = arith.mulf %344, %353 : vector<8x32xf32>
    %355 = vector.broadcast %336 : vector<1x32xf32> to vector<8x32xf32>
    %356 = arith.mulf %354, %355 : vector<8x32xf32>
    %357 = vector.broadcast %338 : vector<1x32xf32> to vector<8x32xf32>
    %358 = arith.addf %356, %357 : vector<8x32xf32>
    %c0_150 = arith.constant 0 : index
    %c0_151 = arith.constant 0 : index
    %c0_152 = arith.constant 0 : index
    %359 = vector.load %arg12[%c0_150, %c0_151, %c0_152] : memref<1x8x32xf32, #tpu.memory_space<vmem>>, vector<1x8x32xf32>
    %360 = vector.shape_cast %359 : vector<1x8x32xf32> to vector<8x32xf32>
    %361 = vector.shape_cast %358 : vector<8x32xf32> to vector<1x8x32xf32>
    tpu.vector_store %arg12[%c0_150, %c0_151, %c0_152], %361 {strides = array<i32>} : memref<1x8x32xf32, #tpu.memory_space<vmem>>, vector<1x8x32xf32>,
    return
  }
  func.func @transform_0(%arg0: i32) -> (i32, i32, i32) {
    %c0_i32 = arith.constant 0 : i32
    %c0_i32_0 = arith.constant 0 : i32
    %c0_i32_1 = arith.constant 0 : i32
    return %arg0, %c0_i32, %c0_i32_0 : i32, i32, i32
  }
  func.func @transform_1(%arg0: i32) -> (i32, i32, i32) {
    %c0_i32 = arith.constant 0 : i32
    %c0_i32_0 = arith.constant 0 : i32
    %c0_i32_1 = arith.constant 0 : i32
    %c0_i32_2 = arith.constant 0 : i32
    return %c0_i32, %c0_i32_0, %c0_i32_1 : i32, i32, i32
  }
  func.func @transform_2(%arg0: i32) -> (i32, i32, i32) {
    %c0_i32 = arith.constant 0 : i32
    %c0_i32_0 = arith.constant 0 : i32
    %c0_i32_1 = arith.constant 0 : i32
    return %arg0, %c0_i32, %c0_i32_0 : i32, i32, i32
  }
  func.func @transform_3(%arg0: i32) -> (i32, i32, i32) {
    %c0_i32 = arith.constant 0 : i32
    %c0_i32_0 = arith.constant 0 : i32
    %c0_i32_1 = arith.constant 0 : i32
    %c0_i32_2 = arith.constant 0 : i32
    return %c0_i32, %c0_i32_0, %c0_i32_1 : i32, i32, i32
  }
  func.func @transform_4(%arg0: i32) -> (i32, i32, i32) {
    %c0_i32 = arith.constant 0 : i32
    %c0_i32_0 = arith.constant 0 : i32
    %c0_i32_1 = arith.constant 0 : i32
    %c0_i32_2 = arith.constant 0 : i32
    return %c0_i32, %c0_i32_0, %c0_i32_1 : i32, i32, i32
  }
  func.func @transform_5(%arg0: i32) -> (i32, i32, i32) {
    %c0_i32 = arith.constant 0 : i32
    %c0_i32_0 = arith.constant 0 : i32
    %c0_i32_1 = arith.constant 0 : i32
    %c0_i32_2 = arith.constant 0 : i32
    return %c0_i32, %c0_i32_0, %c0_i32_1 : i32, i32, i32
  }
  func.func @transform_6(%arg0: i32) -> (i32, i32, i32) {
    %c0_i32 = arith.constant 0 : i32
    %c0_i32_0 = arith.constant 0 : i32
    %c0_i32_1 = arith.constant 0 : i32
    %c0_i32_2 = arith.constant 0 : i32
    return %c0_i32, %c0_i32_0, %c0_i32_1 : i32, i32, i32
  }
  func.func @transform_7(%arg0: i32) -> (i32, i32, i32) {
    %c0_i32 = arith.constant 0 : i32
    %c0_i32_0 = arith.constant 0 : i32
    %c0_i32_1 = arith.constant 0 : i32
    %c0_i32_2 = arith.constant 0 : i32
    return %c0_i32, %c0_i32_0, %c0_i32_1 : i32, i32, i32
  }
  func.func @transform_8(%arg0: i32) -> (i32, i32, i32) {
    %c0_i32 = arith.constant 0 : i32
    %c0_i32_0 = arith.constant 0 : i32
    %c0_i32_1 = arith.constant 0 : i32
    %c0_i32_2 = arith.constant 0 : i32
    return %c0_i32, %c0_i32_0, %c0_i32_1 : i32, i32, i32
  }
  func.func @transform_9(%arg0: i32) -> (i32, i32, i32) {
    %c0_i32 = arith.constant 0 : i32
    %c0_i32_0 = arith.constant 0 : i32
    %c0_i32_1 = arith.constant 0 : i32
    %c0_i32_2 = arith.constant 0 : i32
    return %c0_i32, %c0_i32_0, %c0_i32_1 : i32, i32, i32
  }
  func.func @transform_10(%arg0: i32) -> (i32, i32, i32) {
    %c0_i32 = arith.constant 0 : i32
    %c0_i32_0 = arith.constant 0 : i32
    %c0_i32_1 = arith.constant 0 : i32
    %c0_i32_2 = arith.constant 0 : i32
    return %c0_i32, %c0_i32_0, %c0_i32_1 : i32, i32, i32
  }
  func.func @transform_11(%arg0: i32) -> (i32, i32, i32) {
    %c0_i32 = arith.constant 0 : i32
    %c0_i32_0 = arith.constant 0 : i32
    %c0_i32_1 = arith.constant 0 : i32
    return %arg0, %c0_i32, %c0_i32_0 : i32, i32, i32
  }
  func.func @transform_12(%arg0: i32) -> (i32, i32, i32, i32) {
    %c0_i32 = arith.constant 0 : i32
    %c0_i32_0 = arith.constant 0 : i32
    %c0_i32_1 = arith.constant 0 : i32
    %c0_i32_2 = arith.constant 0 : i32
    return %c0_i32, %arg0, %c0_i32_0, %c0_i32_1 : i32, i32, i32, i32
  }
}

</mosaic_0001>

<llo_original>
// kernel: tpu_custom_call.1
$region0: #{tpu_custom_call.1}
  #allocation0 [shape = 'u32[]', space=smem, size = 0x4, offset = 0x4, fixed_abs, tag = 'smem constant byte address 0x4 - core index']
  #allocation1 [shape = 'u32[144,128]{1,0:T(1,128)}', space=vmem, size = 0x12000, scoped, tag = 'internal scratch']
  %s0 = inlined_call_operand.hbm [shape: f32[2,8,32], index: 0, kind: input, shape index: {}]
  %s1 = inlined_call_operand.hbm [shape: f32[1,8,32], index: 1, kind: input, shape index: {}]
  %s2 = inlined_call_operand.vmem [shape: f32[2,1,8], index: 2, kind: input, shape index: {}]
  %s3 = inlined_call_operand.vmem [shape: bf16[2,32,96], index: 3, kind: input, shape index: {}]
  %s4 = inlined_call_operand.vmem [shape: bf16[2,32,32], index: 4, kind: input, shape index: {}]
  %s5 = inlined_call_operand.vmem [shape: f32[2,1,32], index: 5, kind: input, shape index: {}]
  %s6 = inlined_call_operand.vmem [shape: f32[2,1,32], index: 6, kind: input, shape index: {}]
  %s7 = inlined_call_operand.vmem [shape: bf16[2,32,64], index: 7, kind: input, shape index: {}]
  %s8 = inlined_call_operand.vmem [shape: bf16[2,64,32], index: 8, kind: input, shape index: {}]
  %s9 = inlined_call_operand.vmem [shape: f32[2,1,32], index: 9, kind: input, shape index: {}]
  %s10 = inlined_call_operand.vmem [shape: f32[2,1,32], index: 10, kind: input, shape index: {}]
  %s11 = inlined_call_operand.hbm [shape: f32[2,8,32], index: 11, kind: output, shape index: {0}]
  %s12 = inlined_call_operand.hbm [shape: f32[8,2,8,8], index: 12, kind: output, shape index: {1}]
  %13 = xla_tuple %s11, %s12
  %s14 = sld [smem:[#allocation0]]
  $region93: #{tpu_custom_call.1} parent=0
    _
  %s16 = ssub.s32 1, %s14
  %s17 = scalar_select 0, %s16, %s14
  $region1: #{tpu_custom_call.1} parent=0
    #allocation2 [shape = 'u8[8192]{0}', space=vmem, size = 0x2000, scoped, tag = 'input window, operand 0']
    #allocation3 [shape = 's32[2]{0}', space=sflag, size = 0x8, scoped, tag = 'scoped memory for tpu_custom_call.1']
    #allocation4 [shape = 's32[2]{0}', space=sflag, size = 0x8, scoped, tag = 'scoped memory for tpu_custom_call.1']
    #allocation5 [shape = 'u8[4096]{0}', space=vmem, size = 0x1000, scoped, tag = 'input window, operand 1, single buffered']
    #allocation6 [shape = 's32[1]{0}', space=sflag, size = 0x4, scoped, tag = 'scoped memory for tpu_custom_call.1']
    #allocation7 [shape = 'u8[8192]{0}', space=vmem, size = 0x2000, scoped, tag = 'output window, operand 0']
    #allocation8 [shape = 'u8[65536]{0}', space=vmem, size = 0x10000, scoped, tag = 'output window, operand 1']
    #allocation9 [shape = 's32[2]{0}', space=sflag, size = 0x8, scoped, tag = 'scoped memory for tpu_custom_call.1']
    %18 = vsyncpa [#allocation3], 0
    %s19 = scalar_lea.sflag [#allocation3], 1
    %20 = vsyncpa %s19, 0
    %21 = vsyncpa [#allocation6], 0
    %22 = vsyncpa [#allocation4], 0
    %s23 = scalar_lea.sflag [#allocation4], 1
    %24 = vsyncpa %s23, 0
    %25 = vsyncpa [#allocation9], 0
    %s26 = scalar_lea.sflag [#allocation9], 1
    %27 = vsyncpa %s26, 0
    loop: start=0, step=1, limit=4
    $region2: #{tpu_custom_call.1} parent=1 // loop_pre_header
      _
    $region3: #{tpu_custom_call.1} parent=1 // loop_header
      %s29 = sphi 0, %s33
      %p30 = scmp.ge.s32.totalorder %s29, 4
      %s39 = sphi 0, %s41
      %s42 = sphi 0, %s39
      %s43 = sphi 0, %s42
      %s59 = sphi 0, %s43
      %s63 = sphi 0, %s63
      %s65 = sphi 0, %s63
      %s66 = sphi 0, %s65
      %s80 = sphi 0, %s66
      %s86 = sphi 0, %s88
      %s89 = sphi 0, %s86
      %s90 = sphi 0, %s89
      %s106 = sphi 0, %s90
      %s110 = sphi 0, %s110
      %s112 = sphi 0, %s110
      %s113 = sphi 0, %s112
      %s127 = sphi 0, %s113
      %s131 = sphi 0, %s131
      %s133 = sphi 0, %s131
      %s134 = sphi 0, %s133
      %s148 = sphi 0, %s134
      %s152 = sphi 0, %s152
      %s154 = sphi 0, %s152
      %s155 = sphi 0, %s154
      %s169 = sphi 0, %s155
      %s173 = sphi 0, %s173
      %s175 = sphi 0, %s173
      %s176 = sphi 0, %s175
      %s190 = sphi 0, %s176
      %s194 = sphi 0, %s194
      %s196 = sphi 0, %s194
      %s197 = sphi 0, %s196
      %s211 = sphi 0, %s197
      %s215 = sphi 0, %s215
      %s217 = sphi 0, %s215
      %s218 = sphi 0, %s217
      %s232 = sphi 0, %s218
      %s236 = sphi 0, %s236
      %s238 = sphi 0, %s236
      %s239 = sphi 0, %s238
      %s253 = sphi 0, %s239
      %s257 = sphi 0, %s257
      %s259 = sphi 0, %s257
      %s260 = sphi 0, %s259
      %s274 = sphi 0, %s260
      %s280 = sphi 0, %s282
      %s283 = sphi 0, %s280
      %s284 = sphi 0, %s283
      %s300 = sphi 0, %s284
      %s306 = sphi 0, %s308
      %s309 = sphi 0, %s306
      %s310 = sphi 0, %s309
      %s326 = sphi 0, %s310
    $region4: #{tpu_custom_call.1} parent=1 // loop_header_branch
      %32 = sbr.rel (%p30) target = $region8
    $region5: #{tpu_custom_call.1} parent=1 // loop_body
      %s34 = ssub.s32 %s29, 1
      %s35 = ssub.s32 %s29, 2
      %s36 = sadd.s32 %s29, 1
      %s37 = ssub.s32 %s29, %s36
      %p38 = scmp.eq.s32.totalorder %s37, 0
      %s40 = sadd.s32 %s39, 1
      %s41 = scalar_select %p38, %s39, %s40
      %p44 = pneg %p38
      %p45 = scmp.eq.s32.totalorder %s29, 1
      %p46 = por %p44, %p45
      %p47 = scmp.ne.s32.totalorder %s39, %s42
      %p48 = scmp.eq.s32.totalorder %s29, 0
      %p49 = por %p47, %p48
      %p50 = scmp.ne.s32.totalorder %s39, %s42
      %p51 = scmp.eq.s32.totalorder %s34, 1
      %p52 = por %p50, %p51
      %p53 = scmp.ne.s32.totalorder %s42, %s43
      %p54 = scmp.eq.s32.totalorder %s34, 0
      %p55 = por %p53, %p54
      %p56 = scmp.ne.s32.totalorder %s42, %s43
      %p57 = scmp.eq.s32.totalorder %s35, 1
      %p58 = por %p56, %p57
      %p60 = scmp.ne.s32.totalorder %s43, %s59
      %p61 = scmp.eq.s32.totalorder %s35, 0
      %p62 = por %p60, %p61
      %s64 = sadd.s32 %s63, 1
      %p67 = scmp.eq.s32.totalorder %s29, 1
      %p68 = scmp.ne.s32.totalorder %s63, %s65
      %p69 = scmp.eq.s32.totalorder %s29, 0
      %p70 = por %p68, %p69
      %p71 = scmp.ne.s32.totalorder %s63, %s65
      %p72 = scmp.eq.s32.totalorder %s34, 1
      %p73 = por %p71, %p72
      %p74 = scmp.ne.s32.totalorder %s65, %s66
      %p75 = scmp.eq.s32.totalorder %s34, 0
      %p76 = por %p74, %p75
      %p77 = scmp.ne.s32.totalorder %s65, %s66
      %p78 = scmp.eq.s32.totalorder %s35, 1
      %p79 = por %p77, %p78
      %p81 = scmp.ne.s32.totalorder %s66, %s80
      %p82 = scmp.eq.s32.totalorder %s35, 0
      %p83 = por %p81, %p82
      %s84 = ssub.s32 %s29, %s36
      %p85 = scmp.eq.s32.totalorder %s84, 0
      %s87 = sadd.s32 %s86, 1
      %s88 = scalar_select %p85, %s86, %s87
      %p91 = pneg %p85
      %p92 = scmp.eq.s32.totalorder %s29, 1
      %p93 = por %p91, %p92
      %p94 = scmp.ne.s32.totalorder %s86, %s89
      %p95 = scmp.eq.s32.totalorder %s29, 0
      %p96 = por %p94, %p95
      %p97 = scmp.ne.s32.totalorder %s86, %s89
      %p98 = scmp.eq.s32.totalorder %s34, 1
      %p99 = por %p97, %p98
      %p100 = scmp.ne.s32.totalorder %s89, %s90
      %p101 = scmp.eq.s32.totalorder %s34, 0
      %p102 = por %p100, %p101
      %p103 = scmp.ne.s32.totalorder %s89, %s90
      %p104 = scmp.eq.s32.totalorder %s35, 1
      %p105 = por %p103, %p104
      %p107 = scmp.ne.s32.totalorder %s90, %s106
      %p108 = scmp.eq.s32.totalorder %s35, 0
      %p109 = por %p107, %p108
      %s111 = sadd.s32 %s110, 1
      %p114 = scmp.eq.s32.totalorder %s29, 1
      %p115 = scmp.ne.s32.totalorder %s110, %s112
      %p116 = scmp.eq.s32.totalorder %s29, 0
      %p117 = por %p115, %p116
      %p118 = scmp.ne.s32.totalorder %s110, %s112
      %p119 = scmp.eq.s32.totalorder %s34, 1
      %p120 = por %p118, %p119
      %p121 = scmp.ne.s32.totalorder %s112, %s113
      %p122 = scmp.eq.s32.totalorder %s34, 0
      %p123 = por %p121, %p122
      %p124 = scmp.ne.s32.totalorder %s112, %s113
      %p125 = scmp.eq.s32.totalorder %s35, 1
      %p126 = por %p124, %p125
      %p128 = scmp.ne.s32.totalorder %s113, %s127
      %p129 = scmp.eq.s32.totalorder %s35, 0
      %p130 = por %p128, %p129
      %s132 = sadd.s32 %s131, 1
      %p135 = scmp.eq.s32.totalorder %s29, 1
      %p136 = scmp.ne.s32.totalorder %s131, %s133
      %p137 = scmp.eq.s32.totalorder %s29, 0
      %p138 = por %p136, %p137
      %p139 = scmp.ne.s32.totalorder %s131, %s133
      %p140 = scmp.eq.s32.totalorder %s34, 1
      %p141 = por %p139, %p140
      %p142 = scmp.ne.s32.totalorder %s133, %s134
      %p143 = scmp.eq.s32.totalorder %s34, 0
      %p144 = por %p142, %p143
      %p145 = scmp.ne.s32.totalorder %s133, %s134
      %p146 = scmp.eq.s32.totalorder %s35, 1
      %p147 = por %p145, %p146
      %p149 = scmp.ne.s32.totalorder %s134, %s148
      %p150 = scmp.eq.s32.totalorder %s35, 0
      %p151 = por %p149, %p150
      %s153 = sadd.s32 %s152, 1
      %p156 = scmp.eq.s32.totalorder %s29, 1
      %p157 = scmp.ne.s32.totalorder %s152, %s154
      %p158 = scmp.eq.s32.totalorder %s29, 0
      %p159 = por %p157, %p158
      %p160 = scmp.ne.s32.totalorder %s152, %s154
      %p161 = scmp.eq.s32.totalorder %s34, 1
      %p162 = por %p160, %p161
      %p163 = scmp.ne.s32.totalorder %s154, %s155
      %p164 = scmp.eq.s32.totalorder %s34, 0
      %p165 = por %p163, %p164
      %p166 = scmp.ne.s32.totalorder %s154, %s155
      %p167 = scmp.eq.s32.totalorder %s35, 1
      %p168 = por %p166, %p167
      %p170 = scmp.ne.s32.totalorder %s155, %s169
      %p171 = scmp.eq.s32.totalorder %s35, 0
      %p172 = por %p170, %p171
      %s174 = sadd.s32 %s173, 1
      %p177 = scmp.eq.s32.totalorder %s29, 1
      %p178 = scmp.ne.s32.totalorder %s173, %s175
      %p179 = scmp.eq.s32.totalorder %s29, 0
      %p180 = por %p178, %p179
      %p181 = scmp.ne.s32.totalorder %s173, %s175
      %p182 = scmp.eq.s32.totalorder %s34, 1
      %p183 = por %p181, %p182
      %p184 = scmp.ne.s32.totalorder %s175, %s176
      %p185 = scmp.eq.s32.totalorder %s34, 0
      %p186 = por %p184, %p185
      %p187 = scmp.ne.s32.totalorder %s175, %s176
      %p188 = scmp.eq.s32.totalorder %s35, 1
      %p189 = por %p187, %p188
      %p191 = scmp.ne.s32.totalorder %s176, %s190
      %p192 = scmp.eq.s32.totalorder %s35, 0
      %p193 = por %p191, %p192
      %s195 = sadd.s32 %s194, 1
      %p198 = scmp.eq.s32.totalorder %s29, 1
      %p199 = scmp.ne.s32.totalorder %s194, %s196
      %p200 = scmp.eq.s32.totalorder %s29, 0
      %p201 = por %p199, %p200
      %p202 = scmp.ne.s32.totalorder %s194, %s196
      %p203 = scmp.eq.s32.totalorder %s34, 1
      %p204 = por %p202, %p203
      %p205 = scmp.ne.s32.totalorder %s196, %s197
      %p206 = scmp.eq.s32.totalorder %s34, 0
      %p207 = por %p205, %p206
      %p208 = scmp.ne.s32.totalorder %s196, %s197
      %p209 = scmp.eq.s32.totalorder %s35, 1
      %p210 = por %p208, %p209
      %p212 = scmp.ne.s32.totalorder %s197, %s211
      %p213 = scmp.eq.s32.totalorder %s35, 0
      %p214 = por %p212, %p213
      %s216 = sadd.s32 %s215, 1
      %p219 = scmp.eq.s32.totalorder %s29, 1
      %p220 = scmp.ne.s32.totalorder %s215, %s217
      %p221 = scmp.eq.s32.totalorder %s29, 0
      %p222 = por %p220, %p221
      %p223 = scmp.ne.s32.totalorder %s215, %s217
      %p224 = scmp.eq.s32.totalorder %s34, 1
      %p225 = por %p223, %p224
      %p226 = scmp.ne.s32.totalorder %s217, %s218
      %p227 = scmp.eq.s32.totalorder %s34, 0
      %p228 = por %p226, %p227
      %p229 = scmp.ne.s32.totalorder %s217, %s218
      %p230 = scmp.eq.s32.totalorder %s35, 1
      %p231 = por %p229, %p230
      %p233 = scmp.ne.s32.totalorder %s218, %s232
      %p234 = scmp.eq.s32.totalorder %s35, 0
      %p235 = por %p233, %p234
      %s237 = sadd.s32 %s236, 1
      %p240 = scmp.eq.s32.totalorder %s29, 1
      %p241 = scmp.ne.s32.totalorder %s236, %s238
      %p242 = scmp.eq.s32.totalorder %s29, 0
      %p243 = por %p241, %p242
      %p244 = scmp.ne.s32.totalorder %s236, %s238
      %p245 = scmp.eq.s32.totalorder %s34, 1
      %p246 = por %p244, %p245
      %p247 = scmp.ne.s32.totalorder %s238, %s239
      %p248 = scmp.eq.s32.totalorder %s34, 0
      %p249 = por %p247, %p248
      %p250 = scmp.ne.s32.totalorder %s238, %s239
      %p251 = scmp.eq.s32.totalorder %s35, 1
      %p252 = por %p250, %p251
      %p254 = scmp.ne.s32.totalorder %s239, %s253
      %p255 = scmp.eq.s32.totalorder %s35, 0
      %p256 = por %p254, %p255
      %s258 = sadd.s32 %s257, 1
      %p261 = scmp.eq.s32.totalorder %s29, 1
      %p262 = scmp.ne.s32.totalorder %s257, %s259
      %p263 = scmp.eq.s32.totalorder %s29, 0
      %p264 = por %p262, %p263
      %p265 = scmp.ne.s32.totalorder %s257, %s259
      %p266 = scmp.eq.s32.totalorder %s34, 1
      %p267 = por %p265, %p266
      %p268 = scmp.ne.s32.totalorder %s259, %s260
      %p269 = scmp.eq.s32.totalorder %s34, 0
      %p270 = por %p268, %p269
      %p271 = scmp.ne.s32.totalorder %s259, %s260
      %p272 = scmp.eq.s32.totalorder %s35, 1
      %p273 = por %p271, %p272
      %p275 = scmp.ne.s32.totalorder %s260, %s274
      %p276 = scmp.eq.s32.totalorder %s35, 0
      %p277 = por %p275, %p276
      %s278 = ssub.s32 %s29, %s36
      %p279 = scmp.eq.s32.totalorder %s278, 0
      %s281 = sadd.s32 %s280, 1
      %s282 = scalar_select %p279, %s280, %s281
      %p285 = pneg %p279
      %p286 = scmp.eq.s32.totalorder %s29, 1
      %p287 = por %p285, %p286
      %p288 = scmp.ne.s32.totalorder %s280, %s283
      %p289 = scmp.eq.s32.totalorder %s29, 0
      %p290 = por %p288, %p289
      %p291 = scmp.ne.s32.totalorder %s280, %s283
      %p292 = scmp.eq.s32.totalorder %s34, 1
      %p293 = por %p291, %p292
      %p294 = scmp.ne.s32.totalorder %s283, %s284
      %p295 = scmp.eq.s32.totalorder %s34, 0
      %p296 = por %p294, %p295
      %p297 = scmp.ne.s32.totalorder %s283, %s284
      %p298 = scmp.eq.s32.totalorder %s35, 1
      %p299 = por %p297, %p298
      %p301 = scmp.ne.s32.totalorder %s284, %s300
      %p302 = scmp.eq.s32.totalorder %s35, 0
      %p303 = por %p301, %p302
      %s304 = ssub.s32 %s29, %s36
      %p305 = scmp.eq.s32.totalorder %s304, 0
      %s307 = sadd.s32 %s306, 1
      %s308 = scalar_select %p305, %s306, %s307
      %p311 = pneg %p305
      %p312 = scmp.eq.s32.totalorder %s29, 1
      %p313 = por %p311, %p312
      %p314 = scmp.ne.s32.totalorder %s306, %s309
      %p315 = scmp.eq.s32.totalorder %s29, 0
      %p316 = por %p314, %p315
      %p317 = scmp.ne.s32.totalorder %s306, %s309
      %p318 = scmp.eq.s32.totalorder %s34, 1
      %p319 = por %p317, %p318
      %p320 = scmp.ne.s32.totalorder %s309, %s310
      %p321 = scmp.eq.s32.totalorder %s34, 0
      %p322 = por %p320, %p321
      %p323 = scmp.ne.s32.totalorder %s309, %s310
      %p324 = scmp.eq.s32.totalorder %s35, 1
      %p325 = por %p323, %p324
      %p327 = scmp.ne.s32.totalorder %s310, %s326
      %p328 = scmp.eq.s32.totalorder %s35, 0
      %p329 = por %p327, %p328
      %p330 = scmp.le.s32.totalorder 1, %s29
      %p331 = scmp.lt.s32.totalorder %s29, 3
      %p332 = pnand %p330, %p331
      %p333 = pneg %p332
      // Predicated region
      $region9: #{tpu_custom_call.1} parent=5 // pred_check
        _
      $region10: #{tpu_custom_call.1} parent=5 // pred_check_branch
        %335 = sbr.rel (%p332) target = $region12
      $region11: #{tpu_custom_call.1} parent=5 // pred_region
        %s336 = ssub.s32 %s29, 1
        // Predicated region
        $region13: #{tpu_custom_call.1} parent=11 // pred_check
          %p337 = pneg %p76
        $region14: #{tpu_custom_call.1} parent=11 // pred_check_branch
          %339 = sbr.rel (%p337) target = $region16
        $region15: #{tpu_custom_call.1} parent=11 // pred_region
          %s341 = ssub.s32 128, 128
          %342 = vsyncadd [#allocation6], %s341
          %s344 = sshll.u32 [#allocation5], 4
          %s345 = int_to_ptr.vmem [resolvable:$true] %s344
          %347 = dma.hbm_to_vmem [thread:$0]  %s1, 128, %s345, [#allocation6]
        $region16: #{tpu_custom_call.1} parent=11 // pred_fallthru
          _
        // Predicated region
        $region17: #{tpu_custom_call.1} parent=11 // pred_check
          %p348 = pneg %p123
        $region18: #{tpu_custom_call.1} parent=11 // pred_check_branch
          %350 = sbr.rel (%p348) target = $region20
        $region19: #{tpu_custom_call.1} parent=11 // pred_region
          _
        $region20: #{tpu_custom_call.1} parent=11 // pred_fallthru
          _
        // Predicated region
        $region21: #{tpu_custom_call.1} parent=11 // pred_check
          %p351 = pneg %p144
        $region22: #{tpu_custom_call.1} parent=11 // pred_check_branch
          %353 = sbr.rel (%p351) target = $region24
        $region23: #{tpu_custom_call.1} parent=11 // pred_region
          _
        $region24: #{tpu_custom_call.1} parent=11 // pred_fallthru
          _
        // Predicated region
        $region25: #{tpu_custom_call.1} parent=11 // pred_check
          %p354 = pneg %p165
        $region26: #{tpu_custom_call.1} parent=11 // pred_check_branch
          %356 = sbr.rel (%p354) target = $region28
        $region27: #{tpu_custom_call.1} parent=11 // pred_region
          _
        $region28: #{tpu_custom_call.1} parent=11 // pred_fallthru
          _
        // Predicated region
        $region29: #{tpu_custom_call.1} parent=11 // pred_check
          %p357 = pneg %p186
        $region30: #{tpu_custom_call.1} parent=11 // pred_check_branch
          %359 = sbr.rel (%p357) target = $region32
        $region31: #{tpu_custom_call.1} parent=11 // pred_region
          _
        $region32: #{tpu_custom_call.1} parent=11 // pred_fallthru
          _
        // Predicated region
        $region33: #{tpu_custom_call.1} parent=11 // pred_check
          %p360 = pneg %p207
        $region34: #{tpu_custom_call.1} parent=11 // pred_check_branch
          %362 = sbr.rel (%p360) target = $region36
        $region35: #{tpu_custom_call.1} parent=11 // pred_region
          _
        $region36: #{tpu_custom_call.1} parent=11 // pred_fallthru
          _
        // Predicated region
        $region37: #{tpu_custom_call.1} parent=11 // pred_check
          %p363 = pneg %p228
        $region38: #{tpu_custom_call.1} parent=11 // pred_check_branch
          %365 = sbr.rel (%p363) target = $region40
        $region39: #{tpu_custom_call.1} parent=11 // pred_region
          _
        $region40: #{tpu_custom_call.1} parent=11 // pred_fallthru
          _
        // Predicated region
        $region41: #{tpu_custom_call.1} parent=11 // pred_check
          %p366 = pneg %p249
        $region42: #{tpu_custom_call.1} parent=11 // pred_check_branch
          %368 = sbr.rel (%p366) target = $region44
        $region43: #{tpu_custom_call.1} parent=11 // pred_region
          _
        $region44: #{tpu_custom_call.1} parent=11 // pred_fallthru
          _
        // Predicated region
        $region45: #{tpu_custom_call.1} parent=11 // pred_check
          %p369 = pneg %p270
        $region46: #{tpu_custom_call.1} parent=11 // pred_check_branch
          %371 = sbr.rel (%p369) target = $region48
        $region47: #{tpu_custom_call.1} parent=11 // pred_region
          _
        $region48: #{tpu_custom_call.1} parent=11 // pred_fallthru
          _
      $region12: #{tpu_custom_call.1} parent=5 // pred_fallthru
        _
      %p372 = scmp.lt.s32.totalorder %s29, 2
      // Predicated region
      $region49: #{tpu_custom_call.1} parent=5 // pred_check
        %p373 = pneg %p372
      $region50: #{tpu_custom_call.1} parent=5 // pred_check_branch
        %375 = sbr.rel (%p373) target = $region52
      $region51: #{tpu_custom_call.1} parent=5 // pred_region
        // Predicated region
        $region53: #{tpu_custom_call.1} parent=51 // pred_check
          %p376 = pneg %p49
        $region54: #{tpu_custom_call.1} parent=51 // pred_check_branch
          %378 = sbr.rel (%p376) target = $region56
        $region55: #{tpu_custom_call.1} parent=51 // pred_region
          %s379 = sand.u32 %s39, 1
          %s380 = scalar_lea.sflag [#allocation3], %s379
          %s381 = sand.u32 %s39, 1
          %s382 = smul.addr %s381, 8
          %s383 = scalar_lea.vmem [#allocation2], %s382
          %s385 = ssub.s32 128, 128
          %386 = vsyncadd %s380, %s385
          %s387 = smul.addr %s29, 128
          %s388 = scalar_lea.hbm %s0, %s387
          %s390 = sshll.u32 %s383, 4
          %s391 = int_to_ptr.vmem [resolvable:$true] %s390
          %393 = dma.hbm_to_vmem [thread:$0]  %s388, 128, %s391, %s380
        $region56: #{tpu_custom_call.1} parent=51 // pred_fallthru
          _
        // Predicated region
        $region57: #{tpu_custom_call.1} parent=51 // pred_check
          %p394 = pneg %p96
        $region58: #{tpu_custom_call.1} parent=51 // pred_check_branch
          %396 = sbr.rel (%p394) target = $region60
        $region59: #{tpu_custom_call.1} parent=51 // pred_region
          %p397 = scmp.lt.s32.totalorder %s29, 1
          %s398 = scalar_select %p397, %s29, 1
          %s399 = scalar_lea.vmem %s2, %s398
        $region60: #{tpu_custom_call.1} parent=51 // pred_fallthru
          _
      $region52: #{tpu_custom_call.1} parent=5 // pred_fallthru
        _
      %p400 = scmp.le.s32.totalorder 1, %s29
      %p401 = scmp.lt.s32.totalorder %s29, 3
      %p402 = pnand %p400, %p401
      %p403 = pneg %p402
      // Predicated region
      $region61: #{tpu_custom_call.1} parent=5 // pred_check
        _
      $region62: #{tpu_custom_call.1} parent=5 // pred_check_branch
        %405 = sbr.rel (%p402) target = $region64
      $region63: #{tpu_custom_call.1} parent=5 // pred_region
        %s406 = ssub.s32 %s29, 1
        %s407 = sand.u32 %s42, 1
        %s408 = scalar_lea.sflag [#allocation3], %s407
        %s409 = sand.u32 %s42, 1
        %s410 = smul.addr %s409, 8
        %s411 = scalar_lea.vmem [#allocation2], %s410
        // Predicated region
        $region65: #{tpu_custom_call.1} parent=63 // pred_check
          %p412 = pneg %p55
        $region66: #{tpu_custom_call.1} parent=63 // pred_check_branch
          %414 = sbr.rel (%p412) target = $region68
        $region67: #{tpu_custom_call.1} parent=63 // pred_region
          %415 = dma.done %s408, 128
        $region68: #{tpu_custom_call.1} parent=63 // pred_fallthru
          _
        // Predicated region
        $region69: #{tpu_custom_call.1} parent=63 // pred_check
          %p416 = pneg %p76
        $region70: #{tpu_custom_call.1} parent=63 // pred_check_branch
          %418 = sbr.rel (%p416) target = $region72
        $region71: #{tpu_custom_call.1} parent=63 // pred_region
          %419 = dma.done [#allocation6], 128
        $region72: #{tpu_custom_call.1} parent=63 // pred_fallthru
          _
        %s420 = sand.u32 %s42, 1
        %s421 = scalar_lea.sflag [#allocation3], %s420
        %s422 = sand.u32 %s42, 1
        %s423 = smul.addr %s422, 8
        %s424 = scalar_lea.vmem [#allocation2], %s423
        %p425 = pneg %p55
        %p426 = pneg %p52
        %p427 = pneg %p76
        %p428 = pneg %p73
        %p429 = scmp.lt.s32.totalorder %s34, 1
        %s430 = scalar_select %p429, %s34, 1
        %s431 = scalar_lea.vmem %s2, %s430
        %p432 = pneg %p102
        %p433 = pneg %p99
        %p434 = pneg %p123
        %p435 = pneg %p120
        %p436 = pneg %p144
        %p437 = pneg %p141
        %p438 = pneg %p165
        %p439 = pneg %p162
        %p440 = pneg %p186
        %p441 = pneg %p183
        %p442 = pneg %p207
        %p443 = pneg %p204
        %p444 = pneg %p228
        %p445 = pneg %p225
        %p446 = pneg %p249
        %p447 = pneg %p246
        %p448 = pneg %p270
        %p449 = pneg %p267
        %p450 = pneg %p296
        %p451 = pneg %p293
        %s452 = sand.u32 %s283, 1
        %s453 = scalar_lea.sflag [#allocation4], %s452
        %s454 = sand.u32 %s283, 1
        %s455 = smul.addr %s454, 8
        %s456 = scalar_lea.vmem [#allocation7], %s455
        %p457 = pneg %p322
        %p458 = pneg %p319
        %s459 = sand.u32 %s309, 1
        %s460 = scalar_lea.sflag [#allocation9], %s459
        %s461 = sand.u32 %s309, 1
        %s462 = smul.addr %s461, 64
        %s463 = scalar_lea.vmem [#allocation8], %s462
        %p464 = scmp.lt.s32.totalorder %s34, 1
        %s465 = scalar_select %p464, %s34, 1
        %s466 = scalar_lea.vmem %s2, %s465
        %v468 = vld [vmem:[%s411] sm:$0xff]
        %v469 = vld [vmem:[#allocation5] sm:$0xff]
        %v470 = vadd.f32 %v468, %v469
        %v471 = vld [vmem:[%s466] sm:$0x1]
        %v472 = vpack.c.bf16 %v470, %v470
        %v473 = vld [vmem:[%s3] sm:$0xf]
        %v474 = vld [vmem:[%s3 + $0x4] sm:$0xf]
        %v475 = vld [vmem:[%s3 + $0x8] sm:$0xf]
        %v476 = vld [vmem:[%s3 + $0xc] sm:$0xf]
        %v481 = vunpack.c.l.b16 %v473
        %v482 = vunpack.c.l.b16 %v474
        %v483 = vunpack.c.l.b16 %v475
        %v484 = vunpack.c.l.b16 %v476
        %v485 = vpack.c.b16 %v482, %v481
        %v486 = vpack.c.b16 %v484, %v483
        %vm489 = vcmask 261120
        %v491 = vsel %vm489, %v472, 0
        %493 = vmatprep.subr.bf16.mxu0 0
        %494 = vmatpush1.bf16.msra.mxu0 %v485
        %495 = vmatprep.subr.bf16.mxu0 0
        %496 = vmatpush1.bf16.msra.mxu0 %v486
        %497 = vmatprep.subr.bf16.mxu0 0
        %498 = vmatpush1.bf16.msra.mxu0 0
        %499 = vmatprep.subr.bf16.mxu0 0
        %500 = vmatpush1.bf16.msra.mxu0 0
        %501 = vmatprep.subr.bf16.mxu0 0
        %502 = vmatpush1.bf16.msra.mxu0 0
        %503 = vmatprep.subr.bf16.mxu0 0
        %504 = vmatpush1.bf16.msra.mxu0 0
        %505 = vmatprep.subr.bf16.mxu0 0
        %506 = vmatpush1.bf16.msra.mxu0 0
        %507 = vmatprep.subr.bf16.mxu0 0
        %508 = vmatpush1.bf16.msra.mxu0 0
        %509 = vmatprep.subr.bf16.mxu0 0
        %510 = vmatpush1.bf16.msra.mxu0 0
        %511 = vmatprep.subr.bf16.mxu0 0
        %512 = vmatpush1.bf16.msra.mxu0 0
        %513 = vmatprep.subr.bf16.mxu0 0
        %514 = vmatpush1.bf16.msra.mxu0 0
        %515 = vmatprep.subr.bf16.mxu0 0
        %516 = vmatpush1.bf16.msra.mxu0 0
        %517 = vmatprep.subr.bf16.mxu0 0
        %518 = vmatpush1.bf16.msra.mxu0 0
        %519 = vmatprep.subr.bf16.mxu0 0
        %520 = vmatpush1.bf16.msra.mxu0 0
        %521 = vmatprep.subr.bf16.mxu0 0
        %522 = vmatpush1.bf16.msra.mxu0 0
        %523 = vmatprep.subr.bf16.mxu0 0
        %524 = vmatpush1.bf16.msra.mxu0 0
        %525 = vmatprep.mubr.bf16.mxu0 0
        %526 = vmatmul.mubr.bf16.gmra.mrb[0].mxu0 %v491
        %v527 = vpop.f32.mrb[0].mxu0
        %v528 = vadd.f32 0.0, %v527
        %v529 = vpop.f32.mrb[0].mxu0
        %v530 = vpop.f32.mrb[0].mxu0
        %v531 = vpop.f32.mrb[0].mxu0
        %532 = vdwg.mxu0
        %v533 = vpack.c.bf16 %v528, %v528
        %535 = vrot.lane.b32.xlu0 %v533, 96
        %v536 = vpop.permute.xlu0 %535
        %vm537 = vcmask 64512
        %v539 = vsel %vm537, %v533, 0
        %v542 = vsel %vm537, %v536, 0
        %544 = vmatprep.subr.bf16.mxu0 0
        %545 = vmatpush1.bf16.xpose.msra.mxu0 %v542
        %546 = vmatprep.subr.bf16.mxu0 0
        %547 = vmatpush1.bf16.xpose.msra.mxu0 0
        %548 = vmatprep.subr.bf16.mxu0 0
        %549 = vmatpush1.bf16.xpose.msra.mxu0 0
        %550 = vmatprep.subr.bf16.mxu0 0
        %551 = vmatpush1.bf16.xpose.msra.mxu0 0
        %552 = vmatprep.subr.bf16.mxu0 0
        %553 = vmatpush1.bf16.xpose.msra.mxu0 0
        %554 = vmatprep.subr.bf16.mxu0 0
        %555 = vmatpush1.bf16.xpose.msra.mxu0 0
        %556 = vmatprep.subr.bf16.mxu0 0
        %557 = vmatpush1.bf16.xpose.msra.mxu0 0
        %558 = vmatprep.subr.bf16.mxu0 0
        %559 = vmatpush1.bf16.xpose.msra.mxu0 0
        %560 = vmatprep.subr.bf16.mxu0 0
        %561 = vmatpush1.bf16.xpose.msra.mxu0 0
        %562 = vmatprep.subr.bf16.mxu0 0
        %563 = vmatpush1.bf16.xpose.msra.mxu0 0
        %564 = vmatprep.subr.bf16.mxu0 0
        %565 = vmatpush1.bf16.xpose.msra.mxu0 0
        %566 = vmatprep.subr.bf16.mxu0 0
        %567 = vmatpush1.bf16.xpose.msra.mxu0 0
        %568 = vmatprep.subr.bf16.mxu0 0
        %569 = vmatpush1.bf16.xpose.msra.mxu0 0
        %570 = vmatprep.subr.bf16.mxu0 0
        %571 = vmatpush1.bf16.xpose.msra.mxu0 0
        %572 = vmatprep.subr.bf16.mxu0 0
        %573 = vmatpush1.bf16.xpose.msra.mxu0 0
        %574 = vmatprep.subr.bf16.mxu0 0
        %575 = vmatpush1.bf16.xpose.msra.mxu0 0
        %576 = vmatprep.mubr.bf16.mxu0 0
        %577 = vmatmul.mubr.bf16.gmra.mrb[0].mxu0 %v539
        %v578 = vpop.f32.mrb[0].mxu0
        %v579 = vadd.f32 0.0, %v578
        %v580 = vpop.f32.mrb[0].mxu0
        %v581 = vpop.f32.mrb[0].mxu0
        %v582 = vpop.f32.mrb[0].mxu0
        %583 = vdwg.mxu0
        %v584 = vmul.f32 %v579, 0.35355338
        %v586 = vlaneseq
        %v587 = vshrl.u32 %v586, 7
        %v588 = vsub.s32 0, %v587
        %v589 = vrot.slane %v471, %v588
        %v591 = vadd.f32 %v584, %v589
        %v592 = vsel %vm537, %v591, -inf
        %593 = vmax.xlane.f32.xlu0 %v592
        %v594 = vpop.xlane.xlu0 %593
        %v595 = vsub.f32 %v591, %v594
        %v596 = vmul.f32 %v595, 1.442695
        %v597 = vpow.pop %v596
        %v598 = vsel %vm537, %v597, 0.0
        %599 = vadd.xlane.f32.xlu0 %v598
        %v600 = vpop.xlane.xlu0 %599
        %v601 = vrcp.pop %v600
        %v602 = vmul.f32 %v597, %v601
        %603 = vst.msk [vmem:[%s463] sm:$0xff] %vm537, %v602
        %v604 = vpack.c.bf16 %v602, %v602
        %605 = vrot.lane.b32.xlu0 %v533, 64
        %v606 = vpop.permute.xlu0 %605
        %v608 = vsel %vm537, %v604, 0
        %vm610 = vcmask 1043456
        %v612 = vsel %vm610, %v606, 0
        %614 = vmatprep.subr.bf16.mxu0 0
        %615 = vmatpush1.bf16.msra.mxu0 %v612
        %616 = vmatprep.subr.bf16.mxu0 0
        %617 = vmatpush1.bf16.msra.mxu0 0
        %618 = vmatprep.subr.bf16.mxu0 0
        %619 = vmatpush1.bf16.msra.mxu0 0
        %620 = vmatprep.subr.bf16.mxu0 0
        %621 = vmatpush1.bf16.msra.mxu0 0
        %622 = vmatprep.subr.bf16.mxu0 0
        %623 = vmatpush1.bf16.msra.mxu0 0
        %624 = vmatprep.subr.bf16.mxu0 0
        %625 = vmatpush1.bf16.msra.mxu0 0
        %626 = vmatprep.subr.bf16.mxu0 0
        %627 = vmatpush1.bf16.msra.mxu0 0
        %628 = vmatprep.subr.bf16.mxu0 0
        %629 = vmatpush1.bf16.msra.mxu0 0
        %630 = vmatprep.subr.bf16.mxu0 0
        %631 = vmatpush1.bf16.msra.mxu0 0
        %632 = vmatprep.subr.bf16.mxu0 0
        %633 = vmatpush1.bf16.msra.mxu0 0
        %634 = vmatprep.subr.bf16.mxu0 0
        %635 = vmatpush1.bf16.msra.mxu0 0
        %636 = vmatprep.subr.bf16.mxu0 0
        %637 = vmatpush1.bf16.msra.mxu0 0
        %638 = vmatprep.subr.bf16.mxu0 0
        %639 = vmatpush1.bf16.msra.mxu0 0
        %640 = vmatprep.subr.bf16.mxu0 0
        %641 = vmatpush1.bf16.msra.mxu0 0
        %642 = vmatprep.subr.bf16.mxu0 0
        %643 = vmatpush1.bf16.msra.mxu0 0
        %644 = vmatprep.subr.bf16.mxu0 0
        %645 = vmatpush1.bf16.msra.mxu0 0
        %646 = vmatprep.mubr.bf16.mxu0 0
        %647 = vmatmul.mubr.bf16.gmra.mrb[0].mxu0 %v608
        %v648 = vpop.f32.mrb[0].mxu0
        %v649 = vadd.f32 0.0, %v648
        %v650 = vpop.f32.mrb[0].mxu0
        %v651 = vpop.f32.mrb[0].mxu0
        %v652 = vpop.f32.mrb[0].mxu0
        %653 = vdwg.mxu0
        %654 = vrot.lane.b32.xlu0 %v533, 120
        %v655 = vpop.permute.xlu0 %654
        %656 = vrot.lane.b32.xlu0 %v533, 88
        %v657 = vpop.permute.xlu0 %656
        %v659 = vsel %vm537, %v655, 0
        %v662 = vsel %vm537, %v657, 0
        %664 = vmatprep.subr.bf16.mxu0 0
        %665 = vmatpush1.bf16.xpose.msra.mxu0 %v662
        %666 = vmatprep.subr.bf16.mxu0 0
        %667 = vmatpush1.bf16.xpose.msra.mxu0 0
        %668 = vmatprep.subr.bf16.mxu0 0
        %669 = vmatpush1.bf16.xpose.msra.mxu0 0
        %670 = vmatprep.subr.bf16.mxu0 0
        %671 = vmatpush1.bf16.xpose.msra.mxu0 0
        %672 = vmatprep.subr.bf16.mxu0 0
        %673 = vmatpush1.bf16.xpose.msra.mxu0 0
        %674 = vmatprep.subr.bf16.mxu0 0
        %675 = vmatpush1.bf16.xpose.msra.mxu0 0
        %676 = vmatprep.subr.bf16.mxu0 0
        %677 = vmatpush1.bf16.xpose.msra.mxu0 0
        %678 = vmatprep.subr.bf16.mxu0 0
        %679 = vmatpush1.bf16.xpose.msra.mxu0 0
        %680 = vmatprep.subr.bf16.mxu0 0
        %681 = vmatpush1.bf16.xpose.msra.mxu0 0
        %682 = vmatprep.subr.bf16.mxu0 0
        %683 = vmatpush1.bf16.xpose.msra.mxu0 0
        %684 = vmatprep.subr.bf16.mxu0 0
        %685 = vmatpush1.bf16.xpose.msra.mxu0 0
        %686 = vmatprep.subr.bf16.mxu0 0
        %687 = vmatpush1.bf16.xpose.msra.mxu0 0
        %688 = vmatprep.subr.bf16.mxu0 0
        %689 = vmatpush1.bf16.xpose.msra.mxu0 0
        %690 = vmatprep.subr.bf16.mxu0 0
        %691 = vmatpush1.bf16.xpose.msra.mxu0 0
        %692 = vmatprep.subr.bf16.mxu0 0
        %693 = vmatpush1.bf16.xpose.msra.mxu0 0
        %694 = vmatprep.subr.bf16.mxu0 0
        %695 = vmatpush1.bf16.xpose.msra.mxu0 0
        %696 = vmatprep.mubr.bf16.mxu0 0
        %697 = vmatmul.mubr.bf16.gmra.mrb[0].mxu0 %v659
        %v698 = vpop.f32.mrb[0].mxu0
        %v699 = vadd.f32 0.0, %v698
        %v700 = vpop.f32.mrb[0].mxu0
        %v701 = vpop.f32.mrb[0].mxu0
        %v702 = vpop.f32.mrb[0].mxu0
        %703 = vdwg.mxu0
        %v704 = vmul.f32 %v699, 0.35355338
        %v705 = vadd.f32 %v704, %v589
        %v706 = vsel %vm537, %v705, -inf
        %707 = vmax.xlane.f32.xlu0 %v706
        %v708 = vpop.xlane.xlu0 %707
        %v709 = vsub.f32 %v705, %v708
        %v710 = vmul.f32 %v709, 1.442695
        %v711 = vpow.pop %v710
        %v712 = vsel %vm537, %v711, 0.0
        %713 = vadd.xlane.f32.xlu0 %v712
        %v714 = vpop.xlane.xlu0 %713
        %v715 = vrcp.pop %v714
        %v716 = vmul.f32 %v711, %v715
        %s717 = scalar_lea.vmem %s463, 8 [#allocation8]
        %718 = vst.msk [vmem:[%s717] sm:$0xff] %vm537, %v716
        %v719 = vpack.c.bf16 %v716, %v716
        %720 = vrot.lane.b32.xlu0 %v533, 56
        %v721 = vpop.permute.xlu0 %720
        %v723 = vsel %vm537, %v719, 0
        %v726 = vsel %vm610, %v721, 0
        %728 = vmatprep.subr.bf16.mxu0 0
        %729 = vmatpush1.bf16.msra.mxu0 %v726
        %730 = vmatprep.subr.bf16.mxu0 0
        %731 = vmatpush1.bf16.msra.mxu0 0
        %732 = vmatprep.subr.bf16.mxu0 0
        %733 = vmatpush1.bf16.msra.mxu0 0
        %734 = vmatprep.subr.bf16.mxu0 0
        %735 = vmatpush1.bf16.msra.mxu0 0
        %736 = vmatprep.subr.bf16.mxu0 0
        %737 = vmatpush1.bf16.msra.mxu0 0
        %738 = vmatprep.subr.bf16.mxu0 0
        %739 = vmatpush1.bf16.msra.mxu0 0
        %740 = vmatprep.subr.bf16.mxu0 0
        %741 = vmatpush1.bf16.msra.mxu0 0
        %742 = vmatprep.subr.bf16.mxu0 0
        %743 = vmatpush1.bf16.msra.mxu0 0
        %744 = vmatprep.subr.bf16.mxu0 0
        %745 = vmatpush1.bf16.msra.mxu0 0
        %746 = vmatprep.subr.bf16.mxu0 0
        %747 = vmatpush1.bf16.msra.mxu0 0
        %748 = vmatprep.subr.bf16.mxu0 0
        %749 = vmatpush1.bf16.msra.mxu0 0
        %750 = vmatprep.subr.bf16.mxu0 0
        %751 = vmatpush1.bf16.msra.mxu0 0
        %752 = vmatprep.subr.bf16.mxu0 0
        %753 = vmatpush1.bf16.msra.mxu0 0
        %754 = vmatprep.subr.bf16.mxu0 0
        %755 = vmatpush1.bf16.msra.mxu0 0
        %756 = vmatprep.subr.bf16.mxu0 0
        %757 = vmatpush1.bf16.msra.mxu0 0
        %758 = vmatprep.subr.bf16.mxu0 0
        %759 = vmatpush1.bf16.msra.mxu0 0
        %760 = vmatprep.mubr.bf16.mxu0 0
        %761 = vmatmul.mubr.bf16.gmra.mrb[0].mxu0 %v723
        %v762 = vpop.f32.mrb[0].mxu0
        %v763 = vadd.f32 0.0, %v762
        %v764 = vpop.f32.mrb[0].mxu0
        %v765 = vpop.f32.mrb[0].mxu0
        %v766 = vpop.f32.mrb[0].mxu0
        %767 = vdwg.mxu0
        %768 = vrot.lane.b32.xlu0 %v533, 112
        %v769 = vpop.permute.xlu0 %768
        %770 = vrot.lane.b32.xlu0 %v533, 80
        %v771 = vpop.permute.xlu0 %770
        %v773 = vsel %vm537, %v769, 0
        %v776 = vsel %vm537, %v771, 0
        %778 = vmatprep.subr.bf16.mxu0 0
        %779 = vmatpush1.bf16.xpose.msra.mxu0 %v776
        %780 = vmatprep.subr.bf16.mxu0 0
        %781 = vmatpush1.bf16.xpose.msra.mxu0 0
        %782 = vmatprep.subr.bf16.mxu0 0
        %783 = vmatpush1.bf16.xpose.msra.mxu0 0
        %784 = vmatprep.subr.bf16.mxu0 0
        %785 = vmatpush1.bf16.xpose.msra.mxu0 0
        %786 = vmatprep.subr.bf16.mxu0 0
        %787 = vmatpush1.bf16.xpose.msra.mxu0 0
        %788 = vmatprep.subr.bf16.mxu0 0
        %789 = vmatpush1.bf16.xpose.msra.mxu0 0
        %790 = vmatprep.subr.bf16.mxu0 0
        %791 = vmatpush1.bf16.xpose.msra.mxu0 0
        %792 = vmatprep.subr.bf16.mxu0 0
        %793 = vmatpush1.bf16.xpose.msra.mxu0 0
        %794 = vmatprep.subr.bf16.mxu0 0
        %795 = vmatpush1.bf16.xpose.msra.mxu0 0
        %796 = vmatprep.subr.bf16.mxu0 0
        %797 = vmatpush1.bf16.xpose.msra.mxu0 0
        %798 = vmatprep.subr.bf16.mxu0 0
        %799 = vmatpush1.bf16.xpose.msra.mxu0 0
        %800 = vmatprep.subr.bf16.mxu0 0
        %801 = vmatpush1.bf16.xpose.msra.mxu0 0
        %802 = vmatprep.subr.bf16.mxu0 0
        %803 = vmatpush1.bf16.xpose.msra.mxu0 0
        %804 = vmatprep.subr.bf16.mxu0 0
        %805 = vmatpush1.bf16.xpose.msra.mxu0 0
        %806 = vmatprep.subr.bf16.mxu0 0
        %807 = vmatpush1.bf16.xpose.msra.mxu0 0
        %808 = vmatprep.subr.bf16.mxu0 0
        %809 = vmatpush1.bf16.xpose.msra.mxu0 0
        %810 = vmatprep.mubr.bf16.mxu0 0
        %811 = vmatmul.mubr.bf16.gmra.mrb[0].mxu0 %v773
        %v812 = vpop.f32.mrb[0].mxu0
        %v813 = vadd.f32 0.0, %v812
        %v814 = vpop.f32.mrb[0].mxu0
        %v815 = vpop.f32.mrb[0].mxu0
        %v816 = vpop.f32.mrb[0].mxu0
        %817 = vdwg.mxu0
        %v818 = vmul.f32 %v813, 0.35355338
        %v819 = vadd.f32 %v818, %v589
        %v820 = vsel %vm537, %v819, -inf
        %821 = vmax.xlane.f32.xlu0 %v820
        %v822 = vpop.xlane.xlu0 %821
        %v823 = vsub.f32 %v819, %v822
        %v824 = vmul.f32 %v823, 1.442695
        %v825 = vpow.pop %v824
        %v826 = vsel %vm537, %v825, 0.0
        %827 = vadd.xlane.f32.xlu0 %v826
        %v828 = vpop.xlane.xlu0 %827
        %v829 = vrcp.pop %v828
        %v830 = vmul.f32 %v825, %v829
        %s831 = scalar_lea.vmem %s463, 16 [#allocation8]
        %832 = vst.msk [vmem:[%s831] sm:$0xff] %vm537, %v830
        %v833 = vpack.c.bf16 %v830, %v830
        %834 = vrot.lane.b32.xlu0 %v533, 48
        %v835 = vpop.permute.xlu0 %834
        %v837 = vsel %vm537, %v833, 0
        %v840 = vsel %vm610, %v835, 0
        %842 = vmatprep.subr.bf16.mxu0 0
        %843 = vmatpush1.bf16.msra.mxu0 %v840
        %844 = vmatprep.subr.bf16.mxu0 0
        %845 = vmatpush1.bf16.msra.mxu0 0
        %846 = vmatprep.subr.bf16.mxu0 0
        %847 = vmatpush1.bf16.msra.mxu0 0
        %848 = vmatprep.subr.bf16.mxu0 0
        %849 = vmatpush1.bf16.msra.mxu0 0
        %850 = vmatprep.subr.bf16.mxu0 0
        %851 = vmatpush1.bf16.msra.mxu0 0
        %852 = vmatprep.subr.bf16.mxu0 0
        %853 = vmatpush1.bf16.msra.mxu0 0
        %854 = vmatprep.subr.bf16.mxu0 0
        %855 = vmatpush1.bf16.msra.mxu0 0
        %856 = vmatprep.subr.bf16.mxu0 0
        %857 = vmatpush1.bf16.msra.mxu0 0
        %858 = vmatprep.subr.bf16.mxu0 0
        %859 = vmatpush1.bf16.msra.mxu0 0
        %860 = vmatprep.subr.bf16.mxu0 0
        %861 = vmatpush1.bf16.msra.mxu0 0
        %862 = vmatprep.subr.bf16.mxu0 0
        %863 = vmatpush1.bf16.msra.mxu0 0
        %864 = vmatprep.subr.bf16.mxu0 0
        %865 = vmatpush1.bf16.msra.mxu0 0
        %866 = vmatprep.subr.bf16.mxu0 0
        %867 = vmatpush1.bf16.msra.mxu0 0
        %868 = vmatprep.subr.bf16.mxu0 0
        %869 = vmatpush1.bf16.msra.mxu0 0
        %870 = vmatprep.subr.bf16.mxu0 0
        %871 = vmatpush1.bf16.msra.mxu0 0
        %872 = vmatprep.subr.bf16.mxu0 0
        %873 = vmatpush1.bf16.msra.mxu0 0
        %874 = vmatprep.mubr.bf16.mxu0 0
        %875 = vmatmul.mubr.bf16.gmra.mrb[0].mxu0 %v837
        %v876 = vpop.f32.mrb[0].mxu0
        %v877 = vadd.f32 0.0, %v876
        %v878 = vpop.f32.mrb[0].mxu0
        %v879 = vpop.f32.mrb[0].mxu0
        %v880 = vpop.f32.mrb[0].mxu0
        %881 = vdwg.mxu0
        %882 = vrot.lane.b32.xlu0 %v533, 104
        %v883 = vpop.permute.xlu0 %882
        %884 = vrot.lane.b32.xlu0 %v533, 72
        %v885 = vpop.permute.xlu0 %884
        %v887 = vsel %vm537, %v883, 0
        %v890 = vsel %vm537, %v885, 0
        %892 = vmatprep.subr.bf16.mxu0 0
        %893 = vmatpush1.bf16.xpose.msra.mxu0 %v890
        %894 = vmatprep.subr.bf16.mxu0 0
        %895 = vmatpush1.bf16.xpose.msra.mxu0 0
        %896 = vmatprep.subr.bf16.mxu0 0
        %897 = vmatpush1.bf16.xpose.msra.mxu0 0
        %898 = vmatprep.subr.bf16.mxu0 0
        %899 = vmatpush1.bf16.xpose.msra.mxu0 0
        %900 = vmatprep.subr.bf16.mxu0 0
        %901 = vmatpush1.bf16.xpose.msra.mxu0 0
        %902 = vmatprep.subr.bf16.mxu0 0
        %903 = vmatpush1.bf16.xpose.msra.mxu0 0
        %904 = vmatprep.subr.bf16.mxu0 0
        %905 = vmatpush1.bf16.xpose.msra.mxu0 0
        %906 = vmatprep.subr.bf16.mxu0 0
        %907 = vmatpush1.bf16.xpose.msra.mxu0 0
        %908 = vmatprep.subr.bf16.mxu0 0
        %909 = vmatpush1.bf16.xpose.msra.mxu0 0
        %910 = vmatprep.subr.bf16.mxu0 0
        %911 = vmatpush1.bf16.xpose.msra.mxu0 0
        %912 = vmatprep.subr.bf16.mxu0 0
        %913 = vmatpush1.bf16.xpose.msra.mxu0 0
        %914 = vmatprep.subr.bf16.mxu0 0
        %915 = vmatpush1.bf16.xpose.msra.mxu0 0
        %916 = vmatprep.subr.bf16.mxu0 0
        %917 = vmatpush1.bf16.xpose.msra.mxu0 0
        %918 = vmatprep.subr.bf16.mxu0 0
        %919 = vmatpush1.bf16.xpose.msra.mxu0 0
        %920 = vmatprep.subr.bf16.mxu0 0
        %921 = vmatpush1.bf16.xpose.msra.mxu0 0
        %922 = vmatprep.subr.bf16.mxu0 0
        %923 = vmatpush1.bf16.xpose.msra.mxu0 0
        %924 = vmatprep.mubr.bf16.mxu0 0
        %925 = vmatmul.mubr.bf16.gmra.mrb[0].mxu0 %v887
        %v926 = vpop.f32.mrb[0].mxu0
        %v927 = vadd.f32 0.0, %v926
        %v928 = vpop.f32.mrb[0].mxu0
        %v929 = vpop.f32.mrb[0].mxu0
        %v930 = vpop.f32.mrb[0].mxu0
        %931 = vdwg.mxu0
        %v932 = vmul.f32 %v927, 0.35355338
        %v933 = vadd.f32 %v932, %v589
        %v934 = vsel %vm537, %v933, -inf
        %935 = vmax.xlane.f32.xlu0 %v934
        %v936 = vpop.xlane.xlu0 %935
        %v937 = vsub.f32 %v933, %v936
        %v938 = vmul.f32 %v937, 1.442695
        %v939 = vpow.pop %v938
        %v940 = vsel %vm537, %v939, 0.0
        %941 = vadd.xlane.f32.xlu0 %v940
        %v942 = vpop.xlane.xlu0 %941
        %v943 = vrcp.pop %v942
        %v944 = vmul.f32 %v939, %v943
        %s945 = scalar_lea.vmem %s463, 24 [#allocation8]
        %946 = vst.msk [vmem:[%s945] sm:$0xff] %vm537, %v944
        %v947 = vpack.c.bf16 %v944, %v944
        %948 = vrot.lane.b32.xlu0 %v533, 40
        %v949 = vpop.permute.xlu0 %948
        %v951 = vsel %vm537, %v947, 0
        %v954 = vsel %vm610, %v949, 0
        %956 = vmatprep.subr.bf16.mxu0 0
        %957 = vmatpush1.bf16.msra.mxu0 %v954
        %958 = vmatprep.subr.bf16.mxu0 0
        %959 = vmatpush1.bf16.msra.mxu0 0
        %960 = vmatprep.subr.bf16.mxu0 0
        %961 = vmatpush1.bf16.msra.mxu0 0
        %962 = vmatprep.subr.bf16.mxu0 0
        %963 = vmatpush1.bf16.msra.mxu0 0
        %964 = vmatprep.subr.bf16.mxu0 0
        %965 = vmatpush1.bf16.msra.mxu0 0
        %966 = vmatprep.subr.bf16.mxu0 0
        %967 = vmatpush1.bf16.msra.mxu0 0
        %968 = vmatprep.subr.bf16.mxu0 0
        %969 = vmatpush1.bf16.msra.mxu0 0
        %970 = vmatprep.subr.bf16.mxu0 0
        %971 = vmatpush1.bf16.msra.mxu0 0
        %972 = vmatprep.subr.bf16.mxu0 0
        %973 = vmatpush1.bf16.msra.mxu0 0
        %974 = vmatprep.subr.bf16.mxu0 0
        %975 = vmatpush1.bf16.msra.mxu0 0
        %976 = vmatprep.subr.bf16.mxu0 0
        %977 = vmatpush1.bf16.msra.mxu0 0
        %978 = vmatprep.subr.bf16.mxu0 0
        %979 = vmatpush1.bf16.msra.mxu0 0
        %980 = vmatprep.subr.bf16.mxu0 0
        %981 = vmatpush1.bf16.msra.mxu0 0
        %982 = vmatprep.subr.bf16.mxu0 0
        %983 = vmatpush1.bf16.msra.mxu0 0
        %984 = vmatprep.subr.bf16.mxu0 0
        %985 = vmatpush1.bf16.msra.mxu0 0
        %986 = vmatprep.subr.bf16.mxu0 0
        %987 = vmatpush1.bf16.msra.mxu0 0
        %988 = vmatprep.mubr.bf16.mxu0 0
        %989 = vmatmul.mubr.bf16.gmra.mrb[0].mxu0 %v951
        %v990 = vpop.f32.mrb[0].mxu0
        %v991 = vadd.f32 0.0, %v990
        %v992 = vpop.f32.mrb[0].mxu0
        %v993 = vpop.f32.mrb[0].mxu0
        %v994 = vpop.f32.mrb[0].mxu0
        %995 = vdwg.mxu0
        %997 = vrot.lane.b32.xlu0 %v763, 8
        %v998 = vpop.permute.xlu0 %997
        %1001 = vrot.lane.b32.xlu0 %v877, 16
        %v1002 = vpop.permute.xlu0 %1001
        %1005 = vrot.lane.b32.xlu0 %v991, 24
        %v1006 = vpop.permute.xlu0 %1005
        %v1008 = vsel %vm537, %v649, %v998
        %vm1009 = vcmask 130048
        %v1010 = vsel %vm1009, %v1008, %v1002
        %vm1011 = vcmask 195584
        %v1012 = vsel %vm1011, %v1010, %v1006
        %v1013 = vpack.c.bf16 %v1012, %v1012
        %v1014 = vld [vmem:[%s4] sm:$0xf]
        %v1015 = vld [vmem:[%s4 + $0x4] sm:$0xf]
        %v1016 = vld [vmem:[%s4 + $0x8] sm:$0xf]
        %v1017 = vld [vmem:[%s4 + $0xc] sm:$0xf]
        %v1022 = vunpack.c.l.b16 %v1014
        %v1023 = vunpack.c.l.b16 %v1015
        %v1024 = vunpack.c.l.b16 %v1016
        %v1025 = vunpack.c.l.b16 %v1017
        %v1026 = vpack.c.b16 %v1023, %v1022
        %v1027 = vpack.c.b16 %v1025, %v1024
        %v1031 = vsel %vm489, %v1013, 0
        %1033 = vmatprep.subr.bf16.mxu0 0
        %1034 = vmatpush1.bf16.msra.mxu0 %v1026
        %1035 = vmatprep.subr.bf16.mxu0 0
        %1036 = vmatpush1.bf16.msra.mxu0 %v1027
        %1037 = vmatprep.subr.bf16.mxu0 0
        %1038 = vmatpush1.bf16.msra.mxu0 0
        %1039 = vmatprep.subr.bf16.mxu0 0
        %1040 = vmatpush1.bf16.msra.mxu0 0
        %1041 = vmatprep.subr.bf16.mxu0 0
        %1042 = vmatpush1.bf16.msra.mxu0 0
        %1043 = vmatprep.subr.bf16.mxu0 0
        %1044 = vmatpush1.bf16.msra.mxu0 0
        %1045 = vmatprep.subr.bf16.mxu0 0
        %1046 = vmatpush1.bf16.msra.mxu0 0
        %1047 = vmatprep.subr.bf16.mxu0 0
        %1048 = vmatpush1.bf16.msra.mxu0 0
        %1049 = vmatprep.subr.bf16.mxu0 0
        %1050 = vmatpush1.bf16.msra.mxu0 0
        %1051 = vmatprep.subr.bf16.mxu0 0
        %1052 = vmatpush1.bf16.msra.mxu0 0
        %1053 = vmatprep.subr.bf16.mxu0 0
        %1054 = vmatpush1.bf16.msra.mxu0 0
        %1055 = vmatprep.subr.bf16.mxu0 0
        %1056 = vmatpush1.bf16.msra.mxu0 0
        %1057 = vmatprep.subr.bf16.mxu0 0
        %1058 = vmatpush1.bf16.msra.mxu0 0
        %1059 = vmatprep.subr.bf16.mxu0 0
        %1060 = vmatpush1.bf16.msra.mxu0 0
        %1061 = vmatprep.subr.bf16.mxu0 0
        %1062 = vmatpush1.bf16.msra.mxu0 0
        %1063 = vmatprep.subr.bf16.mxu0 0
        %1064 = vmatpush1.bf16.msra.mxu0 0
        %1065 = vmatprep.mubr.bf16.mxu0 0
        %1066 = vmatmul.mubr.bf16.gmra.mrb[0].mxu0 %v1031
        %v1067 = vpop.f32.mrb[0].mxu0
        %v1068 = vadd.f32 %v470, %v1067
        %v1069 = vpop.f32.mrb[0].mxu0
        %v1070 = vpop.f32.mrb[0].mxu0
        %v1071 = vpop.f32.mrb[0].mxu0
        %1072 = vdwg.mxu0
        %v1073 = vld [vmem:[%s5] sm:$0x1]
        %v1074 = vld [vmem:[%s6] sm:$0x1]
        %v1075 = vsel %vm489, %v1068, 0.0
        %1076 = vadd.xlane.f32.xlu0 %v1075
        %v1077 = vpop.xlane.xlu0 %1076
        %v1078 = vrcp.pop 32.0
        %v1079 = vmul.f32 %v1077, %v1078
        %v1080 = vsub.f32 %v1068, %v1079
        %v1081 = vmul.f32 %v1080, %v1080
        %v1082 = vsel %vm489, %v1081, 0.0
        %1083 = vadd.xlane.f32.xlu0 %v1082
        %v1084 = vpop.xlane.xlu0 %1083
        %v1085 = vmul.f32 %v1084, %v1078
        %v1086 = vadd.f32 %v1085, 1e-05
        %v1087 = vrsqrt.pop %v1086
        %v1088 = vmul.f32 %v1080, %v1087
        %v1090 = vlaneseq
        %v1091 = vshrl.u32 %v1090, 7
        %v1092 = vsub.s32 0, %v1091
        %v1093 = vrot.slane %v1073, %v1092
        %v1095 = vmul.f32 %v1088, %v1093
        %v1097 = vlaneseq
        %v1098 = vshrl.u32 %v1097, 7
        %v1099 = vsub.s32 0, %v1098
        %v1100 = vrot.slane %v1074, %v1099
        %v1102 = vadd.f32 %v1095, %v1100
        %v1103 = vpack.c.bf16 %v1102, %v1102
        %v1104 = vld [vmem:[%s7] sm:$0xf]
        %v1105 = vld [vmem:[%s7 + $0x4] sm:$0xf]
        %v1106 = vld [vmem:[%s7 + $0x8] sm:$0xf]
        %v1107 = vld [vmem:[%s7 + $0xc] sm:$0xf]
        %v1112 = vunpack.c.l.b16 %v1104
        %v1113 = vunpack.c.l.b16 %v1105
        %v1114 = vunpack.c.l.b16 %v1106
        %v1115 = vunpack.c.l.b16 %v1107
        %v1116 = vpack.c.b16 %v1113, %v1112
        %v1117 = vpack.c.b16 %v1115, %v1114
        %v1121 = vsel %vm489, %v1103, 0
        %1123 = vmatprep.subr.bf16.mxu0 0
        %1124 = vmatpush1.bf16.msra.mxu0 %v1116
        %1125 = vmatprep.subr.bf16.mxu0 0
        %1126 = vmatpush1.bf16.msra.mxu0 %v1117
        %1127 = vmatprep.subr.bf16.mxu0 0
        %1128 = vmatpush1.bf16.msra.mxu0 0
        %1129 = vmatprep.subr.bf16.mxu0 0
        %1130 = vmatpush1.bf16.msra.mxu0 0
        %1131 = vmatprep.subr.bf16.mxu0 0
        %1132 = vmatpush1.bf16.msra.mxu0 0
        %1133 = vmatprep.subr.bf16.mxu0 0
        %1134 = vmatpush1.bf16.msra.mxu0 0
        %1135 = vmatprep.subr.bf16.mxu0 0
        %1136 = vmatpush1.bf16.msra.mxu0 0
        %1137 = vmatprep.subr.bf16.mxu0 0
        %1138 = vmatpush1.bf16.msra.mxu0 0
        %1139 = vmatprep.subr.bf16.mxu0 0
        %1140 = vmatpush1.bf16.msra.mxu0 0
        %1141 = vmatprep.subr.bf16.mxu0 0
        %1142 = vmatpush1.bf16.msra.mxu0 0
        %1143 = vmatprep.subr.bf16.mxu0 0
        %1144 = vmatpush1.bf16.msra.mxu0 0
        %1145 = vmatprep.subr.bf16.mxu0 0
        %1146 = vmatpush1.bf16.msra.mxu0 0
        %1147 = vmatprep.subr.bf16.mxu0 0
        %1148 = vmatpush1.bf16.msra.mxu0 0
        %1149 = vmatprep.subr.bf16.mxu0 0
        %1150 = vmatpush1.bf16.msra.mxu0 0
        %1151 = vmatprep.subr.bf16.mxu0 0
        %1152 = vmatpush1.bf16.msra.mxu0 0
        %1153 = vmatprep.subr.bf16.mxu0 0
        %1154 = vmatpush1.bf16.msra.mxu0 0
        %1155 = vmatprep.mubr.bf16.mxu0 0
        %1156 = vmatmul.mubr.bf16.gmra.mrb[0].mxu0 %v1121
        %v1157 = vpop.f32.mrb[0].mxu0
        %v1158 = vadd.f32 0.0, %v1157
        %v1159 = vpop.f32.mrb[0].mxu0
        %v1160 = vpop.f32.mrb[0].mxu0
        %v1161 = vpop.f32.mrb[0].mxu0
        %1162 = vdwg.mxu0
        %v1163 = vmax.f32 %v1158, 0.0
        %v1164 = vpack.c.bf16 %v1163, %v1163
        %v1165 = vld [vmem:[%s8] sm:$0xf]
        %v1166 = vld [vmem:[%s8 + $0x4] sm:$0xf]
        %v1167 = vld [vmem:[%s8 + $0x8] sm:$0xf]
        %v1168 = vld [vmem:[%s8 + $0xc] sm:$0xf]
        %v1169 = vld [vmem:[%s8 + $0x10] sm:$0xf]
        %v1170 = vld [vmem:[%s8 + $0x14] sm:$0xf]
        %v1171 = vld [vmem:[%s8 + $0x18] sm:$0xf]
        %v1172 = vld [vmem:[%s8 + $0x1c] sm:$0xf]
        %v1181 = vunpack.c.l.b16 %v1165
        %v1182 = vunpack.c.l.b16 %v1166
        %v1183 = vunpack.c.l.b16 %v1167
        %v1184 = vunpack.c.l.b16 %v1168
        %v1185 = vunpack.c.l.b16 %v1169
        %v1186 = vunpack.c.l.b16 %v1170
        %v1187 = vunpack.c.l.b16 %v1171
        %v1188 = vunpack.c.l.b16 %v1172
        %v1189 = vpack.c.b16 %v1182, %v1181
        %v1190 = vpack.c.b16 %v1184, %v1183
        %v1191 = vpack.c.b16 %v1186, %v1185
        %v1192 = vpack.c.b16 %v1188, %v1187
        %vm1197 = vcmask 523264
        %v1199 = vsel %vm1197, %v1164, 0
        %1201 = vmatprep.subr.bf16.mxu0 0
        %1202 = vmatpush1.bf16.msra.mxu0 %v1189
        %1203 = vmatprep.subr.bf16.mxu0 0
        %1204 = vmatpush1.bf16.msra.mxu0 %v1190
        %1205 = vmatprep.subr.bf16.mxu0 0
        %1206 = vmatpush1.bf16.msra.mxu0 %v1191
        %1207 = vmatprep.subr.bf16.mxu0 0
        %1208 = vmatpush1.bf16.msra.mxu0 %v1192
        %1209 = vmatprep.subr.bf16.mxu0 0
        %1210 = vmatpush1.bf16.msra.mxu0 0
        %1211 = vmatprep.subr.bf16.mxu0 0
        %1212 = vmatpush1.bf16.msra.mxu0 0
        %1213 = vmatprep.subr.bf16.mxu0 0
        %1214 = vmatpush1.bf16.msra.mxu0 0
        %1215 = vmatprep.subr.bf16.mxu0 0
        %1216 = vmatpush1.bf16.msra.mxu0 0
        %1217 = vmatprep.subr.bf16.mxu0 0
        %1218 = vmatpush1.bf16.msra.mxu0 0
        %1219 = vmatprep.subr.bf16.mxu0 0
        %1220 = vmatpush1.bf16.msra.mxu0 0
        %1221 = vmatprep.subr.bf16.mxu0 0
        %1222 = vmatpush1.bf16.msra.mxu0 0
        %1223 = vmatprep.subr.bf16.mxu0 0
        %1224 = vmatpush1.bf16.msra.mxu0 0
        %1225 = vmatprep.subr.bf16.mxu0 0
        %1226 = vmatpush1.bf16.msra.mxu0 0
        %1227 = vmatprep.subr.bf16.mxu0 0
        %1228 = vmatpush1.bf16.msra.mxu0 0
        %1229 = vmatprep.subr.bf16.mxu0 0
        %1230 = vmatpush1.bf16.msra.mxu0 0
        %1231 = vmatprep.subr.bf16.mxu0 0
        %1232 = vmatpush1.bf16.msra.mxu0 0
        %1233 = vmatprep.mubr.bf16.mxu0 0
        %1234 = vmatmul.mubr.bf16.gmra.mrb[0].mxu0 %v1199
        %v1235 = vpop.f32.mrb[0].mxu0
        %v1236 = vadd.f32 %v1102, %v1235
        %v1237 = vpop.f32.mrb[0].mxu0
        %v1238 = vpop.f32.mrb[0].mxu0
        %v1239 = vpop.f32.mrb[0].mxu0
        %1240 = vdwg.mxu0
        %v1241 = vld [vmem:[%s9] sm:$0x1]
        %v1242 = vld [vmem:[%s10] sm:$0x1]
        %v1243 = vsel %vm489, %v1236, 0.0
        %1244 = vadd.xlane.f32.xlu0 %v1243
        %v1245 = vpop.xlane.xlu0 %1244
        %v1246 = vmul.f32 %v1245, %v1078
        %v1247 = vsub.f32 %v1236, %v1246
        %v1248 = vmul.f32 %v1247, %v1247
        %v1249 = vsel %vm489, %v1248, 0.0
        %1250 = vadd.xlane.f32.xlu0 %v1249
        %v1251 = vpop.xlane.xlu0 %1250
        %v1252 = vmul.f32 %v1251, %v1078
        %v1253 = vadd.f32 %v1252, 1e-05
        %v1254 = vrsqrt.pop %v1253
        %v1255 = vmul.f32 %v1247, %v1254
        %v1257 = vlaneseq
        %v1258 = vshrl.u32 %v1257, 7
        %v1259 = vsub.s32 0, %v1258
        %v1260 = vrot.slane %v1241, %v1259
        %v1262 = vmul.f32 %v1255, %v1260
        %v1264 = vlaneseq
        %v1265 = vshrl.u32 %v1264, 7
        %v1266 = vsub.s32 0, %v1265
        %v1267 = vrot.slane %v1242, %v1266
        %v1269 = vadd.f32 %v1262, %v1267
        %v1270 = vpack.c.bf16 %v1269, %v1269
        %s1271 = scalar_lea.vmem %s3, 16
        %v1272 = vld [vmem:[%s1271] sm:$0xf]
        %v1273 = vld [vmem:[%s1271 + $0x4] sm:$0xf]
        %v1274 = vld [vmem:[%s1271 + $0x8] sm:$0xf]
        %v1275 = vld [vmem:[%s1271 + $0xc] sm:$0xf]
        %v1280 = vunpack.c.l.b16 %v1272
        %v1281 = vunpack.c.l.b16 %v1273
        %v1282 = vunpack.c.l.b16 %v1274
        %v1283 = vunpack.c.l.b16 %v1275
        %v1284 = vpack.c.b16 %v1281, %v1280
        %v1285 = vpack.c.b16 %v1283, %v1282
        %v1289 = vsel %vm489, %v1270, 0
        %1291 = vmatprep.subr.bf16.mxu0 0
        %1292 = vmatpush1.bf16.msra.mxu0 %v1284
        %1293 = vmatprep.subr.bf16.mxu0 0
        %1294 = vmatpush1.bf16.msra.mxu0 %v1285
        %1295 = vmatprep.subr.bf16.mxu0 0
        %1296 = vmatpush1.bf16.msra.mxu0 0
        %1297 = vmatprep.subr.bf16.mxu0 0
        %1298 = vmatpush1.bf16.msra.mxu0 0
        %1299 = vmatprep.subr.bf16.mxu0 0
        %1300 = vmatpush1.bf16.msra.mxu0 0
        %1301 = vmatprep.subr.bf16.mxu0 0
        %1302 = vmatpush1.bf16.msra.mxu0 0
        %1303 = vmatprep.subr.bf16.mxu0 0
        %1304 = vmatpush1.bf16.msra.mxu0 0
        %1305 = vmatprep.subr.bf16.mxu0 0
        %1306 = vmatpush1.bf16.msra.mxu0 0
        %1307 = vmatprep.subr.bf16.mxu0 0
        %1308 = vmatpush1.bf16.msra.mxu0 0
        %1309 = vmatprep.subr.bf16.mxu0 0
        %1310 = vmatpush1.bf16.msra.mxu0 0
        %1311 = vmatprep.subr.bf16.mxu0 0
        %1312 = vmatpush1.bf16.msra.mxu0 0
        %1313 = vmatprep.subr.bf16.mxu0 0
        %1314 = vmatpush1.bf16.msra.mxu0 0
        %1315 = vmatprep.subr.bf16.mxu0 0
        %1316 = vmatpush1.bf16.msra.mxu0 0
        %1317 = vmatprep.subr.bf16.mxu0 0
        %1318 = vmatpush1.bf16.msra.mxu0 0
        %1319 = vmatprep.subr.bf16.mxu0 0
        %1320 = vmatpush1.bf16.msra.mxu0 0
        %1321 = vmatprep.subr.bf16.mxu0 0
        %1322 = vmatpush1.bf16.msra.mxu0 0
        %1323 = vmatprep.mubr.bf16.mxu0 0
        %1324 = vmatmul.mubr.bf16.gmra.mrb[0].mxu0 %v1289
        %v1325 = vpop.f32.mrb[0].mxu0
        %v1326 = vadd.f32 0.0, %v1325
        %v1327 = vpop.f32.mrb[0].mxu0
        %v1328 = vpop.f32.mrb[0].mxu0
        %v1329 = vpop.f32.mrb[0].mxu0
        %1330 = vdwg.mxu0
        %v1331 = vpack.c.bf16 %v1326, %v1326
        %1333 = vrot.lane.b32.xlu0 %v1331, 96
        %v1334 = vpop.permute.xlu0 %1333
        %v1336 = vsel %vm537, %v1331, 0
        %v1339 = vsel %vm537, %v1334, 0
        %1341 = vmatprep.subr.bf16.mxu0 0
        %1342 = vmatpush1.bf16.xpose.msra.mxu0 %v1339
        %1343 = vmatprep.subr.bf16.mxu0 0
        %1344 = vmatpush1.bf16.xpose.msra.mxu0 0
        %1345 = vmatprep.subr.bf16.mxu0 0
        %1346 = vmatpush1.bf16.xpose.msra.mxu0 0
        %1347 = vmatprep.subr.bf16.mxu0 0
        %1348 = vmatpush1.bf16.xpose.msra.mxu0 0
        %1349 = vmatprep.subr.bf16.mxu0 0
        %1350 = vmatpush1.bf16.xpose.msra.mxu0 0
        %1351 = vmatprep.subr.bf16.mxu0 0
        %1352 = vmatpush1.bf16.xpose.msra.mxu0 0
        %1353 = vmatprep.subr.bf16.mxu0 0
        %1354 = vmatpush1.bf16.xpose.msra.mxu0 0
        %1355 = vmatprep.subr.bf16.mxu0 0
        %1356 = vmatpush1.bf16.xpose.msra.mxu0 0
        %1357 = vmatprep.subr.bf16.mxu0 0
        %1358 = vmatpush1.bf16.xpose.msra.mxu0 0
        %1359 = vmatprep.subr.bf16.mxu0 0
        %1360 = vmatpush1.bf16.xpose.msra.mxu0 0
        %1361 = vmatprep.subr.bf16.mxu0 0
        %1362 = vmatpush1.bf16.xpose.msra.mxu0 0
        %1363 = vmatprep.subr.bf16.mxu0 0
        %1364 = vmatpush1.bf16.xpose.msra.mxu0 0
        %1365 = vmatprep.subr.bf16.mxu0 0
        %1366 = vmatpush1.bf16.xpose.msra.mxu0 0
        %1367 = vmatprep.subr.bf16.mxu0 0
        %1368 = vmatpush1.bf16.xpose.msra.mxu0 0
        %1369 = vmatprep.subr.bf16.mxu0 0
        %1370 = vmatpush1.bf16.xpose.msra.mxu0 0
        %1371 = vmatprep.subr.bf16.mxu0 0
        %1372 = vmatpush1.bf16.xpose.msra.mxu0 0
        %1373 = vmatprep.mubr.bf16.mxu0 0
        %1374 = vmatmul.mubr.bf16.gmra.mrb[0].mxu0 %v1336
        %v1375 = vpop.f32.mrb[0].mxu0
        %v1376 = vadd.f32 0.0, %v1375
        %v1377 = vpop.f32.mrb[0].mxu0
        %v1378 = vpop.f32.mrb[0].mxu0
        %v1379 = vpop.f32.mrb[0].mxu0
        %1380 = vdwg.mxu0
        %v1381 = vmul.f32 %v1376, 0.35355338
        %v1382 = vadd.f32 %v1381, %v589
        %v1383 = vsel %vm537, %v1382, -inf
        %1384 = vmax.xlane.f32.xlu0 %v1383
        %v1385 = vpop.xlane.xlu0 %1384
        %v1386 = vsub.f32 %v1382, %v1385
        %v1387 = vmul.f32 %v1386, 1.442695
        %v1388 = vpow.pop %v1387
        %v1389 = vsel %vm537, %v1388, 0.0
        %1390 = vadd.xlane.f32.xlu0 %v1389
        %v1391 = vpop.xlane.xlu0 %1390
        %v1392 = vrcp.pop %v1391
        %v1393 = vmul.f32 %v1388, %v1392
        %s1394 = scalar_lea.vmem %s463, 32 [#allocation8]
        %1395 = vst.msk [vmem:[%s1394] sm:$0xff] %vm537, %v1393
        %v1396 = vpack.c.bf16 %v1393, %v1393
        %1397 = vrot.lane.b32.xlu0 %v1331, 64
        %v1398 = vpop.permute.xlu0 %1397
        %v1400 = vsel %vm537, %v1396, 0
        %v1403 = vsel %vm610, %v1398, 0
        %1405 = vmatprep.subr.bf16.mxu0 0
        %1406 = vmatpush1.bf16.msra.mxu0 %v1403
        %1407 = vmatprep.subr.bf16.mxu0 0
        %1408 = vmatpush1.bf16.msra.mxu0 0
        %1409 = vmatprep.subr.bf16.mxu0 0
        %1410 = vmatpush1.bf16.msra.mxu0 0
        %1411 = vmatprep.subr.bf16.mxu0 0
        %1412 = vmatpush1.bf16.msra.mxu0 0
        %1413 = vmatprep.subr.bf16.mxu0 0
        %1414 = vmatpush1.bf16.msra.mxu0 0
        %1415 = vmatprep.subr.bf16.mxu0 0
        %1416 = vmatpush1.bf16.msra.mxu0 0
        %1417 = vmatprep.subr.bf16.mxu0 0
        %1418 = vmatpush1.bf16.msra.mxu0 0
        %1419 = vmatprep.subr.bf16.mxu0 0
        %1420 = vmatpush1.bf16.msra.mxu0 0
        %1421 = vmatprep.subr.bf16.mxu0 0
        %1422 = vmatpush1.bf16.msra.mxu0 0
        %1423 = vmatprep.subr.bf16.mxu0 0
        %1424 = vmatpush1.bf16.msra.mxu0 0
        %1425 = vmatprep.subr.bf16.mxu0 0
        %1426 = vmatpush1.bf16.msra.mxu0 0
        %1427 = vmatprep.subr.bf16.mxu0 0
        %1428 = vmatpush1.bf16.msra.mxu0 0
        %1429 = vmatprep.subr.bf16.mxu0 0
        %1430 = vmatpush1.bf16.msra.mxu0 0
        %1431 = vmatprep.subr.bf16.mxu0 0
        %1432 = vmatpush1.bf16.msra.mxu0 0
        %1433 = vmatprep.subr.bf16.mxu0 0
        %1434 = vmatpush1.bf16.msra.mxu0 0
        %1435 = vmatprep.subr.bf16.mxu0 0
        %1436 = vmatpush1.bf16.msra.mxu0 0
        %1437 = vmatprep.mubr.bf16.mxu0 0
        %1438 = vmatmul.mubr.bf16.gmra.mrb[0].mxu0 %v1400
        %v1439 = vpop.f32.mrb[0].mxu0
        %v1440 = vadd.f32 0.0, %v1439
        %v1441 = vpop.f32.mrb[0].mxu0
        %v1442 = vpop.f32.mrb[0].mxu0
        %v1443 = vpop.f32.mrb[0].mxu0
        %1444 = vdwg.mxu0
        %1445 = vrot.lane.b32.xlu0 %v1331, 120
        %v1446 = vpop.permute.xlu0 %1445
        %1447 = vrot.lane.b32.xlu0 %v1331, 88
        %v1448 = vpop.permute.xlu0 %1447
        %v1450 = vsel %vm537, %v1446, 0
        %v1453 = vsel %vm537, %v1448, 0
        %1455 = vmatprep.subr.bf16.mxu0 0
        %1456 = vmatpush1.bf16.xpose.msra.mxu0 %v1453
        %1457 = vmatprep.subr.bf16.mxu0 0
        %1458 = vmatpush1.bf16.xpose.msra.mxu0 0
        %1459 = vmatprep.subr.bf16.mxu0 0
        %1460 = vmatpush1.bf16.xpose.msra.mxu0 0
        %1461 = vmatprep.subr.bf16.mxu0 0
        %1462 = vmatpush1.bf16.xpose.msra.mxu0 0
        %1463 = vmatprep.subr.bf16.mxu0 0
        %1464 = vmatpush1.bf16.xpose.msra.mxu0 0
        %1465 = vmatprep.subr.bf16.mxu0 0
        %1466 = vmatpush1.bf16.xpose.msra.mxu0 0
        %1467 = vmatprep.subr.bf16.mxu0 0
        %1468 = vmatpush1.bf16.xpose.msra.mxu0 0
        %1469 = vmatprep.subr.bf16.mxu0 0
        %1470 = vmatpush1.bf16.xpose.msra.mxu0 0
        %1471 = vmatprep.subr.bf16.mxu0 0
        %1472 = vmatpush1.bf16.xpose.msra.mxu0 0
        %1473 = vmatprep.subr.bf16.mxu0 0
        %1474 = vmatpush1.bf16.xpose.msra.mxu0 0
        %1475 = vmatprep.subr.bf16.mxu0 0
        %1476 = vmatpush1.bf16.xpose.msra.mxu0 0
        %1477 = vmatprep.subr.bf16.mxu0 0
        %1478 = vmatpush1.bf16.xpose.msra.mxu0 0
        %1479 = vmatprep.subr.bf16.mxu0 0
        %1480 = vmatpush1.bf16.xpose.msra.mxu0 0
        %1481 = vmatprep.subr.bf16.mxu0 0
        %1482 = vmatpush1.bf16.xpose.msra.mxu0 0
        %1483 = vmatprep.subr.bf16.mxu0 0
        %1484 = vmatpush1.bf16.xpose.msra.mxu0 0
        %1485 = vmatprep.subr.bf16.mxu0 0
        %1486 = vmatpush1.bf16.xpose.msra.mxu0 0
        %1487 = vmatprep.mubr.bf16.mxu0 0
        %1488 = vmatmul.mubr.bf16.gmra.mrb[0].mxu0 %v1450
        %v1489 = vpop.f32.mrb[0].mxu0
        %v1490 = vadd.f32 0.0, %v1489
        %v1491 = vpop.f32.mrb[0].mxu0
        %v1492 = vpop.f32.mrb[0].mxu0
        %v1493 = vpop.f32.mrb[0].mxu0
        %1494 = vdwg.mxu0
        %v1495 = vmul.f32 %v1490, 0.35355338
        %v1496 = vadd.f32 %v1495, %v589
        %v1497 = vsel %vm537, %v1496, -inf
        %1498 = vmax.xlane.f32.xlu0 %v1497
        %v1499 = vpop.xlane.xlu0 %1498
        %v1500 = vsub.f32 %v1496, %v1499
        %v1501 = vmul.f32 %v1500, 1.442695
        %v1502 = vpow.pop %v1501
        %v1503 = vsel %vm537, %v1502, 0.0
        %1504 = vadd.xlane.f32.xlu0 %v1503
        %v1505 = vpop.xlane.xlu0 %1504
        %v1506 = vrcp.pop %v1505
        %v1507 = vmul.f32 %v1502, %v1506
        %s1508 = scalar_lea.vmem %s463, 40 [#allocation8]
        %1509 = vst.msk [vmem:[%s1508] sm:$0xff] %vm537, %v1507
        %v1510 = vpack.c.bf16 %v1507, %v1507
        %1511 = vrot.lane.b32.xlu0 %v1331, 56
        %v1512 = vpop.permute.xlu0 %1511
        %v1514 = vsel %vm537, %v1510, 0
        %v1517 = vsel %vm610, %v1512, 0
        %1519 = vmatprep.subr.bf16.mxu0 0
        %1520 = vmatpush1.bf16.msra.mxu0 %v1517
        %1521 = vmatprep.subr.bf16.mxu0 0
        %1522 = vmatpush1.bf16.msra.mxu0 0
        %1523 = vmatprep.subr.bf16.mxu0 0
        %1524 = vmatpush1.bf16.msra.mxu0 0
        %1525 = vmatprep.subr.bf16.mxu0 0
        %1526 = vmatpush1.bf16.msra.mxu0 0
        %1527 = vmatprep.subr.bf16.mxu0 0
        %1528 = vmatpush1.bf16.msra.mxu0 0
        %1529 = vmatprep.subr.bf16.mxu0 0
        %1530 = vmatpush1.bf16.msra.mxu0 0
        %1531 = vmatprep.subr.bf16.mxu0 0
        %1532 = vmatpush1.bf16.msra.mxu0 0
        %1533 = vmatprep.subr.bf16.mxu0 0
        %1534 = vmatpush1.bf16.msra.mxu0 0
        %1535 = vmatprep.subr.bf16.mxu0 0
        %1536 = vmatpush1.bf16.msra.mxu0 0
        %1537 = vmatprep.subr.bf16.mxu0 0
        %1538 = vmatpush1.bf16.msra.mxu0 0
        %1539 = vmatprep.subr.bf16.mxu0 0
        %1540 = vmatpush1.bf16.msra.mxu0 0
        %1541 = vmatprep.subr.bf16.mxu0 0
        %1542 = vmatpush1.bf16.msra.mxu0 0
        %1543 = vmatprep.subr.bf16.mxu0 0
        %1544 = vmatpush1.bf16.msra.mxu0 0
        %1545 = vmatprep.subr.bf16.mxu0 0
        %1546 = vmatpush1.bf16.msra.mxu0 0
        %1547 = vmatprep.subr.bf16.mxu0 0
        %1548 = vmatpush1.bf16.msra.mxu0 0
        %1549 = vmatprep.subr.bf16.mxu0 0
        %1550 = vmatpush1.bf16.msra.mxu0 0
        %1551 = vmatprep.mubr.bf16.mxu0 0
        %1552 = vmatmul.mubr.bf16.gmra.mrb[0].mxu0 %v1514
        %v1553 = vpop.f32.mrb[0].mxu0
        %v1554 = vadd.f32 0.0, %v1553
        %v1555 = vpop.f32.mrb[0].mxu0
        %v1556 = vpop.f32.mrb[0].mxu0
        %v1557 = vpop.f32.mrb[0].mxu0
        %1558 = vdwg.mxu0
        %1559 = vrot.lane.b32.xlu0 %v1331, 112
        %v1560 = vpop.permute.xlu0 %1559
        %1561 = vrot.lane.b32.xlu0 %v1331, 80
        %v1562 = vpop.permute.xlu0 %1561
        %v1564 = vsel %vm537, %v1560, 0
        %v1567 = vsel %vm537, %v1562, 0
        %1569 = vmatprep.subr.bf16.mxu0 0
        %1570 = vmatpush1.bf16.xpose.msra.mxu0 %v1567
        %1571 = vmatprep.subr.bf16.mxu0 0
        %1572 = vmatpush1.bf16.xpose.msra.mxu0 0
        %1573 = vmatprep.subr.bf16.mxu0 0
        %1574 = vmatpush1.bf16.xpose.msra.mxu0 0
        %1575 = vmatprep.subr.bf16.mxu0 0
        %1576 = vmatpush1.bf16.xpose.msra.mxu0 0
        %1577 = vmatprep.subr.bf16.mxu0 0
        %1578 = vmatpush1.bf16.xpose.msra.mxu0 0
        %1579 = vmatprep.subr.bf16.mxu0 0
        %1580 = vmatpush1.bf16.xpose.msra.mxu0 0
        %1581 = vmatprep.subr.bf16.mxu0 0
        %1582 = vmatpush1.bf16.xpose.msra.mxu0 0
        %1583 = vmatprep.subr.bf16.mxu0 0
        %1584 = vmatpush1.bf16.xpose.msra.mxu0 0
        %1585 = vmatprep.subr.bf16.mxu0 0
        %1586 = vmatpush1.bf16.xpose.msra.mxu0 0
        %1587 = vmatprep.subr.bf16.mxu0 0
        %1588 = vmatpush1.bf16.xpose.msra.mxu0 0
        %1589 = vmatprep.subr.bf16.mxu0 0
        %1590 = vmatpush1.bf16.xpose.msra.mxu0 0
        %1591 = vmatprep.subr.bf16.mxu0 0
        %1592 = vmatpush1.bf16.xpose.msra.mxu0 0
        %1593 = vmatprep.subr.bf16.mxu0 0
        %1594 = vmatpush1.bf16.xpose.msra.mxu0 0
        %1595 = vmatprep.subr.bf16.mxu0 0
        %1596 = vmatpush1.bf16.xpose.msra.mxu0 0
        %1597 = vmatprep.subr.bf16.mxu0 0
        %1598 = vmatpush1.bf16.xpose.msra.mxu0 0
        %1599 = vmatprep.subr.bf16.mxu0 0
        %1600 = vmatpush1.bf16.xpose.msra.mxu0 0
        %1601 = vmatprep.mubr.bf16.mxu0 0
        %1602 = vmatmul.mubr.bf16.gmra.mrb[0].mxu0 %v1564
        %v1603 = vpop.f32.mrb[0].mxu0
        %v1604 = vadd.f32 0.0, %v1603
        %v1605 = vpop.f32.mrb[0].mxu0
        %v1606 = vpop.f32.mrb[0].mxu0
        %v1607 = vpop.f32.mrb[0].mxu0
        %1608 = vdwg.mxu0
        %v1609 = vmul.f32 %v1604, 0.35355338
        %v1610 = vadd.f32 %v1609, %v589
        %v1611 = vsel %vm537, %v1610, -inf
        %1612 = vmax.xlane.f32.xlu0 %v1611
        %v1613 = vpop.xlane.xlu0 %1612
        %v1614 = vsub.f32 %v1610, %v1613
        %v1615 = vmul.f32 %v1614, 1.442695
        %v1616 = vpow.pop %v1615
        %v1617 = vsel %vm537, %v1616, 0.0
        %1618 = vadd.xlane.f32.xlu0 %v1617
        %v1619 = vpop.xlane.xlu0 %1618
        %v1620 = vrcp.pop %v1619
        %v1621 = vmul.f32 %v1616, %v1620
        %s1622 = scalar_lea.vmem %s463, 48 [#allocation8]
        %1623 = vst.msk [vmem:[%s1622] sm:$0xff] %vm537, %v1621
        %v1624 = vpack.c.bf16 %v1621, %v1621
        %1625 = vrot.lane.b32.xlu0 %v1331, 48
        %v1626 = vpop.permute.xlu0 %1625
        %v1628 = vsel %vm537, %v1624, 0
        %v1631 = vsel %vm610, %v1626, 0
        %1633 = vmatprep.subr.bf16.mxu0 0
        %1634 = vmatpush1.bf16.msra.mxu0 %v1631
        %1635 = vmatprep.subr.bf16.mxu0 0
        %1636 = vmatpush1.bf16.msra.mxu0 0
        %1637 = vmatprep.subr.bf16.mxu0 0
        %1638 = vmatpush1.bf16.msra.mxu0 0
        %1639 = vmatprep.subr.bf16.mxu0 0
        %1640 = vmatpush1.bf16.msra.mxu0 0
        %1641 = vmatprep.subr.bf16.mxu0 0
        %1642 = vmatpush1.bf16.msra.mxu0 0
        %1643 = vmatprep.subr.bf16.mxu0 0
        %1644 = vmatpush1.bf16.msra.mxu0 0
        %1645 = vmatprep.subr.bf16.mxu0 0
        %1646 = vmatpush1.bf16.msra.mxu0 0
        %1647 = vmatprep.subr.bf16.mxu0 0
        %1648 = vmatpush1.bf16.msra.mxu0 0
        %1649 = vmatprep.subr.bf16.mxu0 0
        %1650 = vmatpush1.bf16.msra.mxu0 0
        %1651 = vmatprep.subr.bf16.mxu0 0
        %1652 = vmatpush1.bf16.msra.mxu0 0
        %1653 = vmatprep.subr.bf16.mxu0 0
        %1654 = vmatpush1.bf16.msra.mxu0 0
        %1655 = vmatprep.subr.bf16.mxu0 0
        %1656 = vmatpush1.bf16.msra.mxu0 0
        %1657 = vmatprep.subr.bf16.mxu0 0
        %1658 = vmatpush1.bf16.msra.mxu0 0
        %1659 = vmatprep.subr.bf16.mxu0 0
        %1660 = vmatpush1.bf16.msra.mxu0 0
        %1661 = vmatprep.subr.bf16.mxu0 0
        %1662 = vmatpush1.bf16.msra.mxu0 0
        %1663 = vmatprep.subr.bf16.mxu0 0
        %1664 = vmatpush1.bf16.msra.mxu0 0
        %1665 = vmatprep.mubr.bf16.mxu0 0
        %1666 = vmatmul.mubr.bf16.gmra.mrb[0].mxu0 %v1628
        %v1667 = vpop.f32.mrb[0].mxu0
        %v1668 = vadd.f32 0.0, %v1667
        %v1669 = vpop.f32.mrb[0].mxu0
        %v1670 = vpop.f32.mrb[0].mxu0
        %v1671 = vpop.f32.mrb[0].mxu0
        %1672 = vdwg.mxu0
        %1673 = vrot.lane.b32.xlu0 %v1331, 104
        %v1674 = vpop.permute.xlu0 %1673
        %1675 = vrot.lane.b32.xlu0 %v1331, 72
        %v1676 = vpop.permute.xlu0 %1675
        %v1678 = vsel %vm537, %v1674, 0
        %v1681 = vsel %vm537, %v1676, 0
        %1683 = vmatprep.subr.bf16.mxu0 0
        %1684 = vmatpush1.bf16.xpose.msra.mxu0 %v1681
        %1685 = vmatprep.subr.bf16.mxu0 0
        %1686 = vmatpush1.bf16.xpose.msra.mxu0 0
        %1687 = vmatprep.subr.bf16.mxu0 0
        %1688 = vmatpush1.bf16.xpose.msra.mxu0 0
        %1689 = vmatprep.subr.bf16.mxu0 0
        %1690 = vmatpush1.bf16.xpose.msra.mxu0 0
        %1691 = vmatprep.subr.bf16.mxu0 0
        %1692 = vmatpush1.bf16.xpose.msra.mxu0 0
        %1693 = vmatprep.subr.bf16.mxu0 0
        %1694 = vmatpush1.bf16.xpose.msra.mxu0 0
        %1695 = vmatprep.subr.bf16.mxu0 0
        %1696 = vmatpush1.bf16.xpose.msra.mxu0 0
        %1697 = vmatprep.subr.bf16.mxu0 0
        %1698 = vmatpush1.bf16.xpose.msra.mxu0 0
        %1699 = vmatprep.subr.bf16.mxu0 0
        %1700 = vmatpush1.bf16.xpose.msra.mxu0 0
        %1701 = vmatprep.subr.bf16.mxu0 0
        %1702 = vmatpush1.bf16.xpose.msra.mxu0 0
        %1703 = vmatprep.subr.bf16.mxu0 0
        %1704 = vmatpush1.bf16.xpose.msra.mxu0 0
        %1705 = vmatprep.subr.bf16.mxu0 0
        %1706 = vmatpush1.bf16.xpose.msra.mxu0 0
        %1707 = vmatprep.subr.bf16.mxu0 0
        %1708 = vmatpush1.bf16.xpose.msra.mxu0 0
        %1709 = vmatprep.subr.bf16.mxu0 0
        %1710 = vmatpush1.bf16.xpose.msra.mxu0 0
        %1711 = vmatprep.subr.bf16.mxu0 0
        %1712 = vmatpush1.bf16.xpose.msra.mxu0 0
        %1713 = vmatprep.subr.bf16.mxu0 0
        %1714 = vmatpush1.bf16.xpose.msra.mxu0 0
        %1715 = vmatprep.mubr.bf16.mxu0 0
        %1716 = vmatmul.mubr.bf16.gmra.mrb[0].mxu0 %v1678
        %v1717 = vpop.f32.mrb[0].mxu0
        %v1718 = vadd.f32 0.0, %v1717
        %v1719 = vpop.f32.mrb[0].mxu0
        %v1720 = vpop.f32.mrb[0].mxu0
        %v1721 = vpop.f32.mrb[0].mxu0
        %1722 = vdwg.mxu0
        %v1723 = vmul.f32 %v1718, 0.35355338
        %v1724 = vadd.f32 %v1723, %v589
        %v1725 = vsel %vm537, %v1724, -inf
        %1726 = vmax.xlane.f32.xlu0 %v1725
        %v1727 = vpop.xlane.xlu0 %1726
        %v1728 = vsub.f32 %v1724, %v1727
        %v1729 = vmul.f32 %v1728, 1.442695
        %v1730 = vpow.pop %v1729
        %v1731 = vsel %vm537, %v1730, 0.0
        %1732 = vadd.xlane.f32.xlu0 %v1731
        %v1733 = vpop.xlane.xlu0 %1732
        %v1734 = vrcp.pop %v1733
        %v1735 = vmul.f32 %v1730, %v1734
        %s1736 = scalar_lea.vmem %s463, 56 [#allocation8]
        %1737 = vst.msk [vmem:[%s1736] sm:$0xff] %vm537, %v1735
        %v1738 = vpack.c.bf16 %v1735, %v1735
        %1739 = vrot.lane.b32.xlu0 %v1331, 40
        %v1740 = vpop.permute.xlu0 %1739
        %v1742 = vsel %vm537, %v1738, 0
        %v1745 = vsel %vm610, %v1740, 0
        %1747 = vmatprep.subr.bf16.mxu0 0
        %1748 = vmatpush1.bf16.msra.mxu0 %v1745
        %1749 = vmatprep.subr.bf16.mxu0 0
        %1750 = vmatpush1.bf16.msra.mxu0 0
        %1751 = vmatprep.subr.bf16.mxu0 0
        %1752 = vmatpush1.bf16.msra.mxu0 0
        %1753 = vmatprep.subr.bf16.mxu0 0
        %1754 = vmatpush1.bf16.msra.mxu0 0
        %1755 = vmatprep.subr.bf16.mxu0 0
        %1756 = vmatpush1.bf16.msra.mxu0 0
        %1757 = vmatprep.subr.bf16.mxu0 0
        %1758 = vmatpush1.bf16.msra.mxu0 0
        %1759 = vmatprep.subr.bf16.mxu0 0
        %1760 = vmatpush1.bf16.msra.mxu0 0
        %1761 = vmatprep.subr.bf16.mxu0 0
        %1762 = vmatpush1.bf16.msra.mxu0 0
        %1763 = vmatprep.subr.bf16.mxu0 0
        %1764 = vmatpush1.bf16.msra.mxu0 0
        %1765 = vmatprep.subr.bf16.mxu0 0
        %1766 = vmatpush1.bf16.msra.mxu0 0
        %1767 = vmatprep.subr.bf16.mxu0 0
        %1768 = vmatpush1.bf16.msra.mxu0 0
        %1769 = vmatprep.subr.bf16.mxu0 0
        %1770 = vmatpush1.bf16.msra.mxu0 0
        %1771 = vmatprep.subr.bf16.mxu0 0
        %1772 = vmatpush1.bf16.msra.mxu0 0
        %1773 = vmatprep.subr.bf16.mxu0 0
        %1774 = vmatpush1.bf16.msra.mxu0 0
        %1775 = vmatprep.subr.bf16.mxu0 0
        %1776 = vmatpush1.bf16.msra.mxu0 0
        %1777 = vmatprep.subr.bf16.mxu0 0
        %1778 = vmatpush1.bf16.msra.mxu0 0
        %1779 = vmatprep.mubr.bf16.mxu0 0
        %1780 = vmatmul.mubr.bf16.gmra.mrb[0].mxu0 %v1742
        %v1781 = vpop.f32.mrb[0].mxu0
        %v1782 = vadd.f32 0.0, %v1781
        %v1783 = vpop.f32.mrb[0].mxu0
        %v1784 = vpop.f32.mrb[0].mxu0
        %v1785 = vpop.f32.mrb[0].mxu0
        %1786 = vdwg.mxu0
        %1788 = vrot.lane.b32.xlu0 %v1554, 8
        %v1789 = vpop.permute.xlu0 %1788
        %1792 = vrot.lane.b32.xlu0 %v1668, 16
        %v1793 = vpop.permute.xlu0 %1792
        %1796 = vrot.lane.b32.xlu0 %v1782, 24
        %v1797 = vpop.permute.xlu0 %1796
        %v1799 = vsel %vm537, %v1440, %v1789
        %v1800 = vsel %vm1009, %v1799, %v1793
        %v1801 = vsel %vm1011, %v1800, %v1797
        %v1802 = vpack.c.bf16 %v1801, %v1801
        %s1803 = scalar_lea.vmem %s4, 16
        %v1804 = vld [vmem:[%s1803] sm:$0xf]
        %v1805 = vld [vmem:[%s1803 + $0x4] sm:$0xf]
        %v1806 = vld [vmem:[%s1803 + $0x8] sm:$0xf]
        %v1807 = vld [vmem:[%s1803 + $0xc] sm:$0xf]
        %v1812 = vunpack.c.l.b16 %v1804
        %v1813 = vunpack.c.l.b16 %v1805
        %v1814 = vunpack.c.l.b16 %v1806
        %v1815 = vunpack.c.l.b16 %v1807
        %v1816 = vpack.c.b16 %v1813, %v1812
        %v1817 = vpack.c.b16 %v1815, %v1814
        %v1821 = vsel %vm489, %v1802, 0
        %1823 = vmatprep.subr.bf16.mxu0 0
        %1824 = vmatpush1.bf16.msra.mxu0 %v1816
        %1825 = vmatprep.subr.bf16.mxu0 0
        %1826 = vmatpush1.bf16.msra.mxu0 %v1817
        %1827 = vmatprep.subr.bf16.mxu0 0
        %1828 = vmatpush1.bf16.msra.mxu0 0
        %1829 = vmatprep.subr.bf16.mxu0 0
        %1830 = vmatpush1.bf16.msra.mxu0 0
        %1831 = vmatprep.subr.bf16.mxu0 0
        %1832 = vmatpush1.bf16.msra.mxu0 0
        %1833 = vmatprep.subr.bf16.mxu0 0
        %1834 = vmatpush1.bf16.msra.mxu0 0
        %1835 = vmatprep.subr.bf16.mxu0 0
        %1836 = vmatpush1.bf16.msra.mxu0 0
        %1837 = vmatprep.subr.bf16.mxu0 0
        %1838 = vmatpush1.bf16.msra.mxu0 0
        %1839 = vmatprep.subr.bf16.mxu0 0
        %1840 = vmatpush1.bf16.msra.mxu0 0
        %1841 = vmatprep.subr.bf16.mxu0 0
        %1842 = vmatpush1.bf16.msra.mxu0 0
        %1843 = vmatprep.subr.bf16.mxu0 0
        %1844 = vmatpush1.bf16.msra.mxu0 0
        %1845 = vmatprep.subr.bf16.mxu0 0
        %1846 = vmatpush1.bf16.msra.mxu0 0
        %1847 = vmatprep.subr.bf16.mxu0 0
        %1848 = vmatpush1.bf16.msra.mxu0 0
        %1849 = vmatprep.subr.bf16.mxu0 0
        %1850 = vmatpush1.bf16.msra.mxu0 0
        %1851 = vmatprep.subr.bf16.mxu0 0
        %1852 = vmatpush1.bf16.msra.mxu0 0
        %1853 = vmatprep.subr.bf16.mxu0 0
        %1854 = vmatpush1.bf16.msra.mxu0 0
        %1855 = vmatprep.mubr.bf16.mxu0 0
        %1856 = vmatmul.mubr.bf16.gmra.mrb[0].mxu0 %v1821
        %v1857 = vpop.f32.mrb[0].mxu0
        %v1858 = vadd.f32 %v1269, %v1857
        %v1859 = vpop.f32.mrb[0].mxu0
        %v1860 = vpop.f32.mrb[0].mxu0
        %v1861 = vpop.f32.mrb[0].mxu0
        %1862 = vdwg.mxu0
        %s1863 = scalar_lea.vmem %s5, 1
        %v1864 = vld [vmem:[%s1863] sm:$0x1]
        %s1865 = scalar_lea.vmem %s6, 1
        %v1866 = vld [vmem:[%s1865] sm:$0x1]
        %v1867 = vsel %vm489, %v1858, 0.0
        %1868 = vadd.xlane.f32.xlu0 %v1867
        %v1869 = vpop.xlane.xlu0 %1868
        %v1870 = vmul.f32 %v1869, %v1078
        %v1871 = vsub.f32 %v1858, %v1870
        %v1872 = vmul.f32 %v1871, %v1871
        %v1873 = vsel %vm489, %v1872, 0.0
        %1874 = vadd.xlane.f32.xlu0 %v1873
        %v1875 = vpop.xlane.xlu0 %1874
        %v1876 = vmul.f32 %v1875, %v1078
        %v1877 = vadd.f32 %v1876, 1e-05
        %v1878 = vrsqrt.pop %v1877
        %v1879 = vmul.f32 %v1871, %v1878
        %v1881 = vlaneseq
        %v1882 = vshrl.u32 %v1881, 7
        %v1883 = vsub.s32 0, %v1882
        %v1884 = vrot.slane %v1864, %v1883
        %v1886 = vmul.f32 %v1879, %v1884
        %v1888 = vlaneseq
        %v1889 = vshrl.u32 %v1888, 7
        %v1890 = vsub.s32 0, %v1889
        %v1891 = vrot.slane %v1866, %v1890
        %v1893 = vadd.f32 %v1886, %v1891
        %v1894 = vpack.c.bf16 %v1893, %v1893
        %s1895 = scalar_lea.vmem %s7, 16
        %v1896 = vld [vmem:[%s1895] sm:$0xf]
        %v1897 = vld [vmem:[%s1895 + $0x4] sm:$0xf]
        %v1898 = vld [vmem:[%s1895 + $0x8] sm:$0xf]
        %v1899 = vld [vmem:[%s1895 + $0xc] sm:$0xf]
        %v1904 = vunpack.c.l.b16 %v1896
        %v1905 = vunpack.c.l.b16 %v1897
        %v1906 = vunpack.c.l.b16 %v1898
        %v1907 = vunpack.c.l.b16 %v1899
        %v1908 = vpack.c.b16 %v1905, %v1904
        %v1909 = vpack.c.b16 %v1907, %v1906
        %v1913 = vsel %vm489, %v1894, 0
        %1915 = vmatprep.subr.bf16.mxu0 0
        %1916 = vmatpush1.bf16.msra.mxu0 %v1908
        %1917 = vmatprep.subr.bf16.mxu0 0
        %1918 = vmatpush1.bf16.msra.mxu0 %v1909
        %1919 = vmatprep.subr.bf16.mxu0 0
        %1920 = vmatpush1.bf16.msra.mxu0 0
        %1921 = vmatprep.subr.bf16.mxu0 0
        %1922 = vmatpush1.bf16.msra.mxu0 0
        %1923 = vmatprep.subr.bf16.mxu0 0
        %1924 = vmatpush1.bf16.msra.mxu0 0
        %1925 = vmatprep.subr.bf16.mxu0 0
        %1926 = vmatpush1.bf16.msra.mxu0 0
        %1927 = vmatprep.subr.bf16.mxu0 0
        %1928 = vmatpush1.bf16.msra.mxu0 0
        %1929 = vmatprep.subr.bf16.mxu0 0
        %1930 = vmatpush1.bf16.msra.mxu0 0
        %1931 = vmatprep.subr.bf16.mxu0 0
        %1932 = vmatpush1.bf16.msra.mxu0 0
        %1933 = vmatprep.subr.bf16.mxu0 0
        %1934 = vmatpush1.bf16.msra.mxu0 0
        %1935 = vmatprep.subr.bf16.mxu0 0
        %1936 = vmatpush1.bf16.msra.mxu0 0
        %1937 = vmatprep.subr.bf16.mxu0 0
        %1938 = vmatpush1.bf16.msra.mxu0 0
        %1939 = vmatprep.subr.bf16.mxu0 0
        %1940 = vmatpush1.bf16.msra.mxu0 0
        %1941 = vmatprep.subr.bf16.mxu0 0
        %1942 = vmatpush1.bf16.msra.mxu0 0
        %1943 = vmatprep.subr.bf16.mxu0 0
        %1944 = vmatpush1.bf16.msra.mxu0 0
        %1945 = vmatprep.subr.bf16.mxu0 0
        %1946 = vmatpush1.bf16.msra.mxu0 0
        %1947 = vmatprep.mubr.bf16.mxu0 0
        %1948 = vmatmul.mubr.bf16.gmra.mrb[0].mxu0 %v1913
        %v1949 = vpop.f32.mrb[0].mxu0
        %v1950 = vadd.f32 0.0, %v1949
        %v1951 = vpop.f32.mrb[0].mxu0
        %v1952 = vpop.f32.mrb[0].mxu0
        %v1953 = vpop.f32.mrb[0].mxu0
        %1954 = vdwg.mxu0
        %v1955 = vmax.f32 %v1950, 0.0
        %v1956 = vpack.c.bf16 %v1955, %v1955
        %s1957 = scalar_lea.vmem %s8, 32
        %v1958 = vld [vmem:[%s1957] sm:$0xf]
        %v1959 = vld [vmem:[%s1957 + $0x4] sm:$0xf]
        %v1960 = vld [vmem:[%s1957 + $0x8] sm:$0xf]
        %v1961 = vld [vmem:[%s1957 + $0xc] sm:$0xf]
        %v1962 = vld [vmem:[%s1957 + $0x10] sm:$0xf]
        %v1963 = vld [vmem:[%s1957 + $0x14] sm:$0xf]
        %v1964 = vld [vmem:[%s1957 + $0x18] sm:$0xf]
        %v1965 = vld [vmem:[%s1957 + $0x1c] sm:$0xf]
        %v1974 = vunpack.c.l.b16 %v1958
        %v1975 = vunpack.c.l.b16 %v1959
        %v1976 = vunpack.c.l.b16 %v1960
        %v1977 = vunpack.c.l.b16 %v1961
        %v1978 = vunpack.c.l.b16 %v1962
        %v1979 = vunpack.c.l.b16 %v1963
        %v1980 = vunpack.c.l.b16 %v1964
        %v1981 = vunpack.c.l.b16 %v1965
        %v1982 = vpack.c.b16 %v1975, %v1974
        %v1983 = vpack.c.b16 %v1977, %v1976
        %v1984 = vpack.c.b16 %v1979, %v1978
        %v1985 = vpack.c.b16 %v1981, %v1980
        %v1991 = vsel %vm1197, %v1956, 0
        %1993 = vmatprep.subr.bf16.mxu0 0
        %1994 = vmatpush1.bf16.msra.mxu0 %v1982
        %1995 = vmatprep.subr.bf16.mxu0 0
        %1996 = vmatpush1.bf16.msra.mxu0 %v1983
        %1997 = vmatprep.subr.bf16.mxu0 0
        %1998 = vmatpush1.bf16.msra.mxu0 %v1984
        %1999 = vmatprep.subr.bf16.mxu0 0
        %2000 = vmatpush1.bf16.msra.mxu0 %v1985
        %2001 = vmatprep.subr.bf16.mxu0 0
        %2002 = vmatpush1.bf16.msra.mxu0 0
        %2003 = vmatprep.subr.bf16.mxu0 0
        %2004 = vmatpush1.bf16.msra.mxu0 0
        %2005 = vmatprep.subr.bf16.mxu0 0
        %2006 = vmatpush1.bf16.msra.mxu0 0
        %2007 = vmatprep.subr.bf16.mxu0 0
        %2008 = vmatpush1.bf16.msra.mxu0 0
        %2009 = vmatprep.subr.bf16.mxu0 0
        %2010 = vmatpush1.bf16.msra.mxu0 0
        %2011 = vmatprep.subr.bf16.mxu0 0
        %2012 = vmatpush1.bf16.msra.mxu0 0
        %2013 = vmatprep.subr.bf16.mxu0 0
        %2014 = vmatpush1.bf16.msra.mxu0 0
        %2015 = vmatprep.subr.bf16.mxu0 0
        %2016 = vmatpush1.bf16.msra.mxu0 0
        %2017 = vmatprep.subr.bf16.mxu0 0
        %2018 = vmatpush1.bf16.msra.mxu0 0
        %2019 = vmatprep.subr.bf16.mxu0 0
        %2020 = vmatpush1.bf16.msra.mxu0 0
        %2021 = vmatprep.subr.bf16.mxu0 0
        %2022 = vmatpush1.bf16.msra.mxu0 0
        %2023 = vmatprep.subr.bf16.mxu0 0
        %2024 = vmatpush1.bf16.msra.mxu0 0
        %2025 = vmatprep.mubr.bf16.mxu0 0
        %2026 = vmatmul.mubr.bf16.gmra.mrb[0].mxu0 %v1991
        %v2027 = vpop.f32.mrb[0].mxu0
        %v2028 = vadd.f32 %v1893, %v2027
        %v2029 = vpop.f32.mrb[0].mxu0
        %v2030 = vpop.f32.mrb[0].mxu0
        %v2031 = vpop.f32.mrb[0].mxu0
        %2032 = vdwg.mxu0
        %s2033 = scalar_lea.vmem %s9, 1
        %v2034 = vld [vmem:[%s2033] sm:$0x1]
        %s2035 = scalar_lea.vmem %s10, 1
        %v2036 = vld [vmem:[%s2035] sm:$0x1]
        %v2037 = vsel %vm489, %v2028, 0.0
        %2038 = vadd.xlane.f32.xlu0 %v2037
        %v2039 = vpop.xlane.xlu0 %2038
        %v2040 = vmul.f32 %v2039, %v1078
        %v2041 = vsub.f32 %v2028, %v2040
        %v2042 = vmul.f32 %v2041, %v2041
        %v2043 = vsel %vm489, %v2042, 0.0
        %2044 = vadd.xlane.f32.xlu0 %v2043
        %v2045 = vpop.xlane.xlu0 %2044
        %v2046 = vmul.f32 %v2045, %v1078
        %v2047 = vadd.f32 %v2046, 1e-05
        %v2048 = vrsqrt.pop %v2047
        %v2049 = vmul.f32 %v2041, %v2048
        %v2051 = vlaneseq
        %v2052 = vshrl.u32 %v2051, 7
        %v2053 = vsub.s32 0, %v2052
        %v2054 = vrot.slane %v2034, %v2053
        %v2056 = vmul.f32 %v2049, %v2054
        %v2058 = vlaneseq
        %v2059 = vshrl.u32 %v2058, 7
        %v2060 = vsub.s32 0, %v2059
        %v2061 = vrot.slane %v2036, %v2060
        %v2063 = vadd.f32 %v2056, %v2061
        %2064 = vst.msk [vmem:[%s456] sm:$0xff] %vm489, %v2063
        %s2065 = sand.u32 %s283, 1
        %s2066 = scalar_lea.sflag [#allocation4], %s2065
        %s2067 = sand.u32 %s283, 1
        %s2068 = smul.addr %s2067, 8
        %s2069 = scalar_lea.vmem [#allocation7], %s2068
        %s2070 = sand.u32 %s309, 1
        %s2071 = scalar_lea.sflag [#allocation9], %s2070
        %s2072 = sand.u32 %s309, 1
        %s2073 = smul.addr %s2072, 64
        %s2074 = scalar_lea.vmem [#allocation8], %s2073
        // Predicated region
        $region73: #{tpu_custom_call.1} parent=63 // pred_check
          %p2075 = pneg %p293
        $region74: #{tpu_custom_call.1} parent=63 // pred_check_branch
          %2077 = sbr.rel (%p2075) target = $region76
        $region75: #{tpu_custom_call.1} parent=63 // pred_region
          %s2079 = ssub.s32 128, 128
          %2080 = vsyncadd %s2066, %s2079
          %s2081 = smul.addr %s34, 128
          %s2082 = scalar_lea.hbm %s11, %s2081
          %s2084 = sshll.u32 %s2069, 4
          %s2085 = int_to_ptr.vmem [resolvable:$true] %s2084
          %2087 = dma.vmem_to_hbm [thread:$0]  %s2085, 128, %s2082, %s2066
        $region76: #{tpu_custom_call.1} parent=63 // pred_fallthru
          _
        // Predicated region
        $region77: #{tpu_custom_call.1} parent=63 // pred_check
          %p2088 = pneg %p319
        $region78: #{tpu_custom_call.1} parent=63 // pred_check_branch
          %2090 = sbr.rel (%p2088) target = $region80
        $region79: #{tpu_custom_call.1} parent=63 // pred_region
          %s2092 = ssub.s32 1024, 1024
          %2093 = vsyncadd %s2071, %s2092
          %s2094 = smul.addr %s34, 128
          %s2095 = scalar_lea.hbm %s12, %s2094
          %s2096 = sshll.u32 %s2074, 4
          %s2097 = int_to_ptr.vmem [resolvable:$true] %s2096
          %2102 = dma.vmem_to_hbm [thread:$0]  %s2097, 1024, %s2095, %s2071, 128, 256, 8
        $region80: #{tpu_custom_call.1} parent=63 // pred_fallthru
          _
      $region64: #{tpu_custom_call.1} parent=5 // pred_fallthru
        _
      %p2103 = scmp.le.s32.totalorder 2, %s29
      // Predicated region
      $region81: #{tpu_custom_call.1} parent=5 // pred_check
        %p2104 = pneg %p2103
      $region82: #{tpu_custom_call.1} parent=5 // pred_check_branch
        %2106 = sbr.rel (%p2104) target = $region84
      $region83: #{tpu_custom_call.1} parent=5 // pred_region
        %s2107 = ssub.s32 %s29, 2
        // Predicated region
        $region85: #{tpu_custom_call.1} parent=83 // pred_check
          %p2108 = pneg %p299
        $region86: #{tpu_custom_call.1} parent=83 // pred_check_branch
          %2110 = sbr.rel (%p2108) target = $region88
        $region87: #{tpu_custom_call.1} parent=83 // pred_region
          %s2111 = sand.u32 %s284, 1
          %s2112 = scalar_lea.sflag [#allocation4], %s2111
          %s2113 = sand.u32 %s284, 1
          %s2114 = smul.addr %s2113, 8
          %s2115 = scalar_lea.vmem [#allocation7], %s2114
          %2116 = dma.done %s2112, 128
        $region88: #{tpu_custom_call.1} parent=83 // pred_fallthru
          _
        // Predicated region
        $region89: #{tpu_custom_call.1} parent=83 // pred_check
          %p2117 = pneg %p325
        $region90: #{tpu_custom_call.1} parent=83 // pred_check_branch
          %2119 = sbr.rel (%p2117) target = $region92
        $region91: #{tpu_custom_call.1} parent=83 // pred_region
          %s2120 = sand.u32 %s310, 1
          %s2121 = scalar_lea.sflag [#allocation9], %s2120
          %s2122 = sand.u32 %s310, 1
          %s2123 = smul.addr %s2122, 64
          %s2124 = scalar_lea.vmem [#allocation8], %s2123
          %2125 = dma.done %s2121, 1024
        $region92: #{tpu_custom_call.1} parent=83 // pred_fallthru
          _
      $region84: #{tpu_custom_call.1} parent=5 // pred_fallthru
        _
    $region6: #{tpu_custom_call.1} parent=1 // loop_footer
      %s33 = sadd.s32 1, %s29
    $region7: #{tpu_custom_call.1} parent=1 // loop_footer_branch
      %28 = sbr.rel target = $region3
    $region8: #{tpu_custom_call.1} parent=1 // loop_exit
      _
    %2126 = vsyncpa [#allocation3], 1
    %s2127 = scalar_lea.sflag [#allocation3], 1
    %2128 = vsyncpa %s2127, 1
    %2129 = vsyncpa [#allocation6], 1
    %2130 = vsyncpa [#allocation4], 1
    %s2131 = scalar_lea.sflag [#allocation4], 1
    %2132 = vsyncpa %s2131, 1
    %2133 = vsyncpa [#allocation9], 1
    %s2134 = scalar_lea.sflag [#allocation9], 1
    %2135 = vsyncpa %s2134, 1

</llo_original>
